<compile_context>
chip_gen: v6e
topology: v6e:2x2x1
jax: 0.10.0
libtpu: 0.0.40
codegen_flags: <defaults>
</compile_context>

<pallas_src>
import functools
import math

import jax
import jax.numpy as jnp
from jax import lax
from jax.experimental import pallas as pl
from jax.experimental.pallas import tpu as pltpu


# ----------------------------------------------------------------------------
# static helpers
# ----------------------------------------------------------------------------
def _next_pow2(v):
    v = int(v)
    return 1 if v <= 1 else 1 << (v - 1).bit_length()


def _ilog2(v):
    v = int(v)
    assert v > 0 and (v & (v - 1)) == 0, f"{v} is not a power of two"
    return v.bit_length() - 1


def _fold_factor(couts, hw):
    """Row-group size g so that every g*cout is a multiple of 128 lanes."""
    g = 1
    for c in couts:
        need = 128 // math.gcd(128, int(c))
        g = g * need // math.gcd(g, need)  # lcm
    while g > 1 and hw % g != 0:
        g //= 2
    return g


# ----------------------------------------------------------------------------
# in-kernel helpers (traced inside the Pallas kernels)
# ----------------------------------------------------------------------------
def _roll_rows(x, q):
    r = x.shape[0]
    q = q % r
    if q == 0:
        return x
    return jnp.concatenate([x[q:], x[:q]], axis=0)


def _shift_flat(x, k):
    """y[r, l] = x.flat[r*L + l + k]  (flat row-major order, wrap-around).

    Wrapped elements correspond to out-of-image taps and are zeroed by the
    source mask before this is called, so the wrap value is never used."""
    r, l_dim = x.shape
    if k == 0:
        return x
    q, t = divmod(k, l_dim)  # python floor-div handles negative k
    if t == 0:
        return _roll_rows(x, q)
    a = jnp.concatenate([x[:, t:], x[:, :t]], axis=1)
    b0 = _roll_rows(a, q)
    b1 = _roll_rows(b0, 1)
    lane = lax.broadcasted_iota(jnp.int32, (r, l_dim), 1)
    return jnp.where(lane < (l_dim - t), b0, b1)


def _accumulate_taps(xv, acc, w_of, *, cin, g, H, W):
    """acc += 3x3-conv(unfold(xv)) @ W_tap for all 9 taps, folded layout.

    xv:   (R, g*cin) f32 -- row-group-folded NHWC feature map (one image).
    w_of: tap -> (g*cin, N) bf16 block-diagonal folded weight (N may be the
          concatenation of several heads along the output axis).
    acc:  (R, N) f32 accumulator.
    """
    R, L = xv.shape
    rr = lax.broadcasted_iota(jnp.int32, (R, L), 0)
    ll = lax.broadcasted_iota(jnp.int32, (R, L), 1)
    # source-pixel (h, w) coordinate of every folded element (pow2 shifts only)
    m = (rr << _ilog2(g)) + (ll >> _ilog2(cin))
    hs = m >> _ilog2(W)
    ws = m & (W - 1)
    for dy in range(3):
        for dx in range(3):
            # mask the SOURCE pixels that feed no valid output for this tap
            conds = []
            if dy == 0:
                conds.append(hs < (H - 1))
            if dy == 2:
                conds.append(hs >= 1)
            if dx == 0:
                conds.append(ws < (W - 1))
            if dx == 2:
                conds.append(ws >= 1)
            if conds:
                ok = conds[0]
                for c in conds[1:]:
                    ok = jnp.logical_and(ok, c)
                src = jnp.where(ok, xv, 0.0)
            else:
                src = xv
            shifted = _shift_flat(src, ((dy - 1) * W + (dx - 1)) * cin)
            acc = acc + jnp.dot(shifted.astype(jnp.bfloat16),
                                w_of(dy * 3 + dx),
                                preferred_element_type=jnp.float32)
    return acc


def _apply_act(y, act):
    if act == "relu":
        return jnp.maximum(y, 0.0)
    if act == "clamp":  # torch.clamp(sr, -1, 1) fused into the final conv
        return jnp.clip(y, -1.0, 1.0)
    return y


# ----------------------------------------------------------------------------
# Pallas kernels
# ----------------------------------------------------------------------------
def _conv_kernel(*refs, n_in, n_heads, cins, l_outs, acts, g, H, W, R):
    # refs: n_in inputs, n_in merged weights, 1 merged bias, n_heads outputs
    x_refs = refs[:n_in]
    w_refs = refs[n_in:2 * n_in]
    b_ref = refs[2 * n_in]
    o_refs = refs[2 * n_in + 1:]
    l_tot = sum(l_outs)
    acc = jnp.zeros((R, l_tot), jnp.float32)
    for i in range(n_in):
        xv = x_refs[i][0]  # (R, g*cin_i) f32
        acc = _accumulate_taps(
            xv, acc, lambda t, i=i: w_refs[i][t],
            cin=cins[i], g=g, H=H, W=W)
    y = acc + b_ref[...]
    off = 0
    for h in range(n_heads):
        yo = _apply_act(y[:, off:off + l_outs[h]], acts[h])
        o_refs[h][0] = yo.astype(o_refs[h].dtype)
        off += l_outs[h]


def _res_block_kernel(x_ref, w1_ref, b1_ref, w2_ref, b2_ref, o_ref, *,
                      cin, g, H, W, R, L, res_scale):
    x = x_ref[0]  # (R, L) f32
    acc = _accumulate_taps(x, jnp.zeros((R, L), jnp.float32),
                           lambda t: w1_ref[t], cin=cin, g=g, H=H, W=W)
    r = jnp.maximum(acc + b1_ref[...], 0.0)
    acc = _accumulate_taps(r, jnp.zeros((R, L), jnp.float32),
                           lambda t: w2_ref[t], cin=cin, g=g, H=H, W=W)
    y = acc + b2_ref[...]
    o_ref[0] = (x + res_scale * y).astype(o_ref.dtype)


# ----------------------------------------------------------------------------
# wrapper-side weight / activation folding
# ----------------------------------------------------------------------------
def _fold_weight(w, g):
    """(3,3,cin,cout) -> (9, g*cin, g*cout) block-diagonal, bf16."""
    cin, cout = int(w.shape[2]), int(w.shape[3])
    wt = w.reshape(9, cin, cout).astype(jnp.float32)
    eye = jnp.eye(g, dtype=jnp.float32)
    blk = jnp.einsum("tio,jk->tjiko", wt, eye)
    return blk.reshape(9, g * cin, g * cout).astype(jnp.bfloat16)


def _fold_bias(b, g):
    b = b.astype(jnp.float32)
    return jnp.tile(b, g).reshape(1, g * b.shape[0])


def fused_conv3x3(inputs, heads):
    """3x3 / pad=1 / stride=1 conv(s), NHWC, as a single Pallas kernel.

    inputs: list of (N,H,W,Cin_i) arrays -- logically concatenated channels.
    heads:  list of dicts {w:(3,3,sum(Cin),Cout), b:(Cout,), act:str}; every
            head consumes the same (concatenated) input.
    Returns one (N,H,W,Cout_h) array per head.
    """
    n, H, W, _ = inputs[0].shape
    hw = H * W
    assert (W & (W - 1)) == 0, "W must be a power of two"
    orig_cins = [int(x.shape[-1]) for x in inputs]

    xs, cins = [], []
    for x in inputs:
        c = int(x.shape[-1])
        cp = _next_pow2(c)
        if cp != c:  # pad channels (only 3 -> 4 in practice)
            x = jnp.pad(x, ((0, 0), (0, 0), (0, 0), (0, cp - c)))
        xs.append(x)
        cins.append(cp)

    prepped = []
    for hd in heads:
        w, b = hd["w"], hd["b"]
        cout = int(w.shape[-1])
        cop = _next_pow2(cout)
        if cop != cout:
            w = jnp.pad(w, ((0, 0), (0, 0), (0, 0), (0, cop - cout)))
            b = jnp.pad(b, ((0, cop - cout),))
        prepped.append((w, b, hd.get("act", "none"), cout, cop))

    g = _fold_factor([p[4] for p in prepped], hw)
    R = hw // g

    # free (contiguous) reshapes into the lane-dense folded view
    xfs = [x.reshape(n, R, g * c) for x, c in zip(xs, cins)]

    # per-input folded weight, heads concatenated along the output axis so
    # every tap is a single wide MXU matmul
    wfs = []
    for i in range(len(xs)):
        off = sum(orig_cins[:i])
        parts = []
        for (w, _b, _a, _co, _cop) in prepped:
            w_sl = w[:, :, off:off + orig_cins[i], :]
            if cins[i] != orig_cins[i]:
                w_sl = jnp.pad(
                    w_sl, ((0, 0), (0, 0), (0, cins[i] - orig_cins[i]), (0, 0)))
            parts.append(_fold_weight(w_sl, g))
        wfs.append(jnp.concatenate(parts, axis=-1) if len(parts) > 1
                   else parts[0])
    bf = jnp.concatenate([_fold_bias(b, g) for (_w, b, _a, _co, _cop)
                          in prepped], axis=-1)

    l_outs = tuple(g * p[4] for p in prepped)
    acts = tuple(p[2] for p in prepped)

    kernel = functools.partial(
        _conv_kernel, n_in=len(xs), n_heads=len(heads), cins=tuple(cins),
        l_outs=l_outs, acts=acts, g=g, H=H, W=W, R=R)
    in_specs = (
        [pl.BlockSpec((1, R, g * c), lambda b_: (b_, 0, 0)) for c in cins]
        + [pl.BlockSpec(wf.shape, lambda b_: (0, 0, 0)) for wf in wfs]
        + [pl.BlockSpec(bf.shape, lambda b_: (0, 0))])
    out_specs = [pl.BlockSpec((1, R, lo), lambda b_: (b_, 0, 0))
                 for lo in l_outs]
    out_shape = [jax.ShapeDtypeStruct((n, R, lo), jnp.float32)
                 for lo in l_outs]

    outs = pl.pallas_call(
        kernel,
        grid=(n,),
        in_specs=in_specs,
        out_specs=out_specs,
        out_shape=out_shape,
        compiler_params=pltpu.CompilerParams(
            dimension_semantics=("parallel",)),
    )(*xfs, *wfs, bf)

    results = []
    for (_w, _b, _a, cout, cop), o in zip(prepped, outs):
        y = o.reshape(n, H, W, cop)
        if cop != cout:
            y = y[..., :cout]
        results.append(y)
    return results


def res_block(x, p, res_scale):
    """Fused conv-relu-conv + x + res_scale*r in one Pallas kernel."""
    n, H, W, F = x.shape
    hw = H * W
    assert (W & (W - 1)) == 0 and (F & (F - 1)) == 0
    g = _fold_factor([F], hw)
    R = hw // g
    L = g * F
    xf = x.reshape(n, R, L)
    w1 = _fold_weight(p["c1"]["w"], g)
    b1 = _fold_bias(p["c1"]["b"], g)
    w2 = _fold_weight(p["c2"]["w"], g)
    b2 = _fold_bias(p["c2"]["b"], g)
    kernel = functools.partial(
        _res_block_kernel, cin=F, g=g, H=H, W=W, R=R, L=L,
        res_scale=float(res_scale))
    out = pl.pallas_call(
        kernel,
        grid=(n,),
        in_specs=[
            pl.BlockSpec((1, R, L), lambda b_: (b_, 0, 0)),
            pl.BlockSpec((9, L, L), lambda b_: (0, 0, 0)),
            pl.BlockSpec((1, L), lambda b_: (0, 0)),
            pl.BlockSpec((9, L, L), lambda b_: (0, 0, 0)),
            pl.BlockSpec((1, L), lambda b_: (0, 0)),
        ],
        out_specs=pl.BlockSpec((1, R, L), lambda b_: (b_, 0, 0)),
        out_shape=jax.ShapeDtypeStruct((n, R, L), jnp.float32),
        compiler_params=pltpu.CompilerParams(
            dimension_semantics=("parallel",)),
    )(xf, w1, b1, w2, b2)
    return out.reshape(n, H, W, F)


# ----------------------------------------------------------------------------
# tiny XLA glue (kept outside Pallas: negligible tensors)
# ----------------------------------------------------------------------------
def maxpool2(x):
    n, h, w, c = x.shape
    return x.reshape(n, h // 2, 2, w // 2, 2, c).max(axis=(2, 4))


def pixel_shuffle2(x):
    n, h, w, c = x.shape
    f = c // 4
    x = x.reshape(n, h, w, 2, 2, f)
    x = x.transpose(0, 1, 3, 2, 4, 5)
    return x.reshape(n, 2 * h, 2 * w, f)


def to_nhwc(x):
    return jnp.transpose(x, (0, 2, 3, 1))


def to_nchw(x):
    return jnp.transpose(x, (0, 3, 1, 2))


# ----------------------------------------------------------------------------
# deterministic parameter construction
# ----------------------------------------------------------------------------
class _KeyGen:
    def __init__(self, seed):
        self._key = jax.random.PRNGKey(seed)

    def next(self):
        self._key, k = jax.random.split(self._key)
        return k


def conv_params(kg, cin, cout):
    w = jax.random.normal(kg.next(), (3, 3, cin, cout), jnp.float32)
    w = w * (1.0 / (3.0 * math.sqrt(cin)))
    b = 0.01 * jax.random.normal(kg.next(), (cout,), jnp.float32)
    return {"w": w, "b": b}


def res_block_params(kg, f):
    return {"c1": conv_params(kg, f, f), "c2": conv_params(kg, f, f)}


def build_params(args):
    C1, C2, C3, F = args["C1"], args["C2"], args["C3"], args["n_feats"]
    nrb = list(map(int, args["num_res_blocks"].split("+")))
    kg = _KeyGen(0)
    enc = {
        "e1": conv_params(kg, 3, C1),
        "e2": conv_params(kg, C1, C2),
        "e3": conv_params(kg, C2, C3),
    }
    ltg_p = {
        "head": conv_params(kg, C1, F),
        "msfp": [res_block_params(kg, F) for _ in range(args["num_MSFP"])],
        "tail3": conv_params(kg, F, C3),
        "up2": conv_params(kg, F, 4 * F),
        "tail2": conv_params(kg, F, C2),
        "up4": conv_params(kg, F, 4 * F),
        "tail1": conv_params(kg, F, C1),
    }
    dec = {
        "head": conv_params(kg, 3, F),
        "rb0": [res_block_params(kg, F) for _ in range(nrb[0])],
        "fuse3": conv_params(kg, F + C3, F),
        "rb1": [res_block_params(kg, F) for _ in range(nrb[1])],
        "up2": conv_params(kg, F, 4 * F),
        "fuse2": conv_params(kg, F + C2 + C2, F),
        "rb2": [res_block_params(kg, F) for _ in range(nrb[2])],
        "up4": conv_params(kg, F, 4 * F),
        "fuse1": conv_params(kg, F + C1 + C1, F),
        "rb3": [res_block_params(kg, F) for _ in range(nrb[3])],
        "tail": conv_params(kg, F, 3),
    }
    return {"enc": enc, "ltg": ltg_p, "dec": dec}


def _head(p, act="none"):
    return {"w": p["w"], "b": p["b"], "act": act}


# ----------------------------------------------------------------------------
# submodules (forward)
# ----------------------------------------------------------------------------
def encoder(p, x):
    lv1 = fused_conv3x3([x], [_head(p["e1"], "relu")])[0]
    lv2 = fused_conv3x3([maxpool2(lv1)], [_head(p["e2"], "relu")])[0]
    lv3 = fused_conv3x3([maxpool2(lv2)], [_head(p["e3"], "relu")])[0]
    return lv1, lv2, lv3


def ltg(p, lr_lv1, lr_lv2, lr_lv3, res_scale):
    f = fused_conv3x3([lr_lv1], [_head(p["head"], "relu")])[0]
    for rb in p["msfp"]:
        f = res_block(f, rb, res_scale)
    # tail3 & up2 share input f -> one multi-head kernel (single wide matmul)
    gen_lv3, pre2 = fused_conv3x3(
        [f], [_head(p["tail3"], "none"), _head(p["up2"], "relu")])
    u2 = pixel_shuffle2(pre2)
    gen_lv2, pre4 = fused_conv3x3(
        [u2], [_head(p["tail2"], "none"), _head(p["up4"], "relu")])
    u4 = pixel_shuffle2(pre4)
    gen_lv1 = fused_conv3x3([u4], [_head(p["tail1"], "none")])[0]
    return gen_lv3, gen_lv2, gen_lv1


def decoder(p, lr, lrsr_lv1, lrsr_lv2, T_lv3, T_lv2, T_lv1, res_scale):
    x = fused_conv3x3([lr], [_head(p["head"], "relu")])[0]
    for rb in p["rb0"]:
        x = res_block(x, rb, res_scale)
    x = fused_conv3x3([x, T_lv3], [_head(p["fuse3"], "relu")])[0]
    for rb in p["rb1"]:
        x = res_block(x, rb, res_scale)
    x = pixel_shuffle2(fused_conv3x3([x], [_head(p["up2"], "relu")])[0])
    x = fused_conv3x3([x, T_lv2, lrsr_lv2], [_head(p["fuse2"], "relu")])[0]
    for rb in p["rb2"]:
        x = res_block(x, rb, res_scale)
    x = pixel_shuffle2(fused_conv3x3([x], [_head(p["up4"], "relu")])[0])
    x = fused_conv3x3([x, T_lv1, lrsr_lv1], [_head(p["fuse1"], "relu")])[0]
    for rb in p["rb3"]:
        x = res_block(x, rb, res_scale)
    sr = fused_conv3x3([x], [_head(p["tail"], "clamp")])[0]
    return sr


# ----------------------------------------------------------------------------
# LTGNet forward
# ----------------------------------------------------------------------------
def ltgnet_forward(params, args, lr=None, lrsr=None, ref=None, refsr=None,
                   sr=None):
    res_scale = args["res_scale"]
    if sr is not None:
        # Encoder_copy.load_state_dict(Encoder.state_dict()) -> shared weights
        lv1, lv2, lv3 = encoder(params["enc"], (to_nhwc(sr) + 1.0) / 2.0)
        return to_nchw(lv1), to_nchw(lv2), to_nchw(lv3)

    lrsr_lv1, lrsr_lv2, _ = encoder(params["enc"], (to_nhwc(lrsr) + 1.0) / 2.0)
    lr_lv1, lr_lv2, lr_lv3 = encoder(params["enc"], (to_nhwc(lr) + 1.0) / 2.0)
    g3, g2, g1 = ltg(params["ltg"], lr_lv1, lr_lv2, lr_lv3, res_scale)

    if ref is not None:
        # TODO(synk): training branch (SearchTransfer patch matching + bicubic
        # F.interpolate of the relevance map S) not implemented; submodule
        # source unavailable.
        raise NotImplementedError("training branch (ref is not None)")

    T_lv1, T_lv2, T_lv3 = g1, g2, g3
    sr_out = decoder(params["dec"], to_nhwc(lr), lrsr_lv1, lrsr_lv2,
                     T_lv3, T_lv2, T_lv1, res_scale)
    return to_nchw(sr_out)   # (N, 3, 4*H_lr, 4*W_lr), already clamped


# ----------------------------------------------------------------------------
# self-test of the fused kernels against lax.conv (bf16-rounded reference)
# ----------------------------------------------------------------------------
def _self_test():
    def ref_conv(x, w, b, act):
        xb = x.astype(jnp.bfloat16).astype(jnp.float32)
        wb = w.astype(jnp.bfloat16).astype(jnp.float32)
        y = lax.conv_general_dilated(
            xb, wb, (1, 1), "SAME",
            dimension_numbers=("NHWC", "HWIO", "NHWC")) + b
        return _apply_act(y, act)

    key = jax.random.PRNGKey(42)
    k1, k2, k3, k4, k5, k6 = jax.random.split(key, 6)

    # (a) 3-channel input (channel-padding path)
    x = jax.random.normal(k1, (2, 8, 8, 3), jnp.float32)
    w = jax.random.normal(k2, (3, 3, 3, 16), jnp.float32) * 0.1
    b = jax.random.normal(k3, (16,), jnp.float32) * 0.1
    got = fused_conv3x3([x], [dict(w=w, b=b, act="relu")])[0]
    want = ref_conv(x, w, b, "relu")
    assert float(jnp.max(jnp.abs(got - want))) < 1e-2, "conv self-test (a)"

    # (b) multi-input, multi-head (merged-weight path)
    x1 = jax.random.normal(k4, (2, 8, 8, 16), jnp.float32)
    x2 = jax.random.normal(k5, (2, 8, 8, 64), jnp.float32)
    w1 = jax.random.normal(k6, (3, 3, 80, 16), jnp.float32) * 0.05
    b1 = jnp.zeros((16,), jnp.float32)
    w2 = jax.random.normal(k2, (3, 3, 80, 64), jnp.float32) * 0.05
    b2 = jnp.zeros((64,), jnp.float32)
    got1, got2 = fused_conv3x3(
        [x1, x2], [dict(w=w1, b=b1, act="relu"), dict(w=w2, b=b2, act="none")])
    xc = jnp.concatenate([x1, x2], axis=-1)
    assert float(jnp.max(jnp.abs(got1 - ref_conv(xc, w1, b1, "relu")))) < 1e-2
    assert float(jnp.max(jnp.abs(got2 - ref_conv(xc, w2, b2, "none")))) < 1e-2

    # (c) fused residual block
    xr = jax.random.normal(k3, (2, 16, 16, 16), jnp.float32)
    p = {"c1": {"w": jax.random.normal(k1, (3, 3, 16, 16), jnp.float32) * 0.08,
                "b": jnp.zeros((16,), jnp.float32)},
         "c2": {"w": jax.random.normal(k5, (3, 3, 16, 16), jnp.float32) * 0.08,
                "b": jnp.zeros((16,), jnp.float32)}}
    got = res_block(xr, p, 0.5)
    r = ref_conv(xr, p["c1"]["w"], p["c1"]["b"], "relu")
    r = ref_conv(r, p["c2"]["w"], p["c2"]["b"], "none")
    want = xr + 0.5 * r
    assert float(jnp.max(jnp.abs(got - want))) < 2e-2, "res-block self-test"


# ----------------------------------------------------------------------------
# Main
# ----------------------------------------------------------------------------
if __name__ == "__main__":
    args = {
        "num_res_blocks": "1+1+1+1",   # args.num_res_blocks
        "n_feats": 16,                 # args.n_feats
        "res_scale": 1.0,              # args.res_scale
        "num_MSFP": 1,                 # args.num_MSFP
        "C1": 16, "C2": 32, "C3": 64,  # encoder level widths (VGG-style ratio)
    }

    _self_test()

    params = build_params(args)

    key = jax.random.PRNGKey(0)
    k_lr, k_lrsr = jax.random.split(key)
    # NCHW inputs, values in [-1, 1] as the module expects
    lr = jnp.tanh(jax.random.normal(k_lr, (2, 3, 8, 8), jnp.float32))
    lrsr = jnp.tanh(jax.random.normal(k_lrsr, (2, 3, 32, 32), jnp.float32))

    fwd = jax.jit(lambda lr_, lrsr_: ltgnet_forward(params, args,
                                                    lr=lr_, lrsr=lrsr_))
    sr = fwd(lr, lrsr)
    sr = jax.block_until_ready(sr)
    assert sr.shape == (2, 3, 32, 32)
    assert bool(jnp.all(jnp.isfinite(sr)))
    assert float(jnp.max(jnp.abs(sr))) <= 1.0 + 1e-6
    print("KERNEL_OK")
</pallas_src>

<mosaic_0001>
module attributes {stable_mosaic.version = 11 : i64} {
  func.func @_conv_kernel(%arg0: i32, %arg1: memref<1x8x32xf32, #tpu.memory_space<vmem>>, %arg2: memref<9x32x128xbf16, #tpu.memory_space<vmem>>, %arg3: memref<1x128xf32, #tpu.memory_space<vmem>>, %arg4: memref<1x8x128xf32, #tpu.memory_space<vmem>>) attributes {dimension_semantics = [#tpu.dimension_semantics<parallel>], iteration_bounds = array<i64: 2>, scalar_prefetch = 0 : i64, scratch_operands = 0 : i64, tpu.core_type = #tpu.core_type<tc>, window_params = [{transform_indices = @transform_0, window_bounds = array<i64: 1, 8, 32>}, {pipeline_mode = #tpu.pipeline_mode<synchronous>, transform_indices = @transform_1, window_bounds = array<i64: 9, 32, 128>}, {pipeline_mode = #tpu.pipeline_mode<synchronous>, transform_indices = @transform_2, window_bounds = array<i64: 1, 128>}, {transform_indices = @transform_3, window_bounds = array<i64: 1, 8, 128>}]} {
    %cst = arith.constant 0.000000e+00 : f32
    %0 = vector.broadcast %cst : f32 to vector<8x128xf32>
    %c0 = arith.constant 0 : index
    %c0_0 = arith.constant 0 : index
    %c0_1 = arith.constant 0 : index
    %1 = vector.load %arg1[%c0, %c0_0, %c0_1] : memref<1x8x32xf32, #tpu.memory_space<vmem>>, vector<1x8x32xf32>
    %2 = vector.shape_cast %1 : vector<1x8x32xf32> to vector<8x32xf32>
    %3 = tpu.iota {dimensions = array<i32: 0>} : vector<8x32xi32>
    %4 = tpu.iota {dimensions = array<i32: 1>} : vector<8x32xi32>
    %c3_i32 = arith.constant 3 : i32
    %5 = vector.broadcast %c3_i32 : i32 to vector<8x32xi32>
    %6 = arith.shli %3, %5 : vector<8x32xi32>
    %c2_i32 = arith.constant 2 : i32
    %7 = vector.broadcast %c2_i32 : i32 to vector<8x32xi32>
    %8 = arith.shrsi %4, %7 : vector<8x32xi32>
    %9 = arith.addi %6, %8 : vector<8x32xi32>
    %c3_i32_2 = arith.constant 3 : i32
    %10 = vector.broadcast %c3_i32_2 : i32 to vector<8x32xi32>
    %11 = arith.shrsi %9, %10 : vector<8x32xi32>
    %c7_i32 = arith.constant 7 : i32
    %12 = vector.broadcast %c7_i32 : i32 to vector<8x32xi32>
    %13 = arith.andi %9, %12 : vector<8x32xi32>
    %c7_i32_3 = arith.constant 7 : i32
    %14 = vector.broadcast %c7_i32_3 : i32 to vector<8x32xi32>
    %15 = arith.cmpi slt, %11, %14 : vector<8x32xi32>
    %c7_i32_4 = arith.constant 7 : i32
    %16 = vector.broadcast %c7_i32_4 : i32 to vector<8x32xi32>
    %17 = arith.cmpi slt, %13, %16 : vector<8x32xi32>
    %18 = arith.andi %15, %17 : vector<8x32xi1>
    %cst_5 = arith.constant 0.000000e+00 : f32
    %19 = vector.broadcast %cst_5 : f32 to vector<8x32xf32>
    %20 = arith.select %18, %2, %19 : vector<8x32xi1>, vector<8x32xf32>
    %21 = vector.extract_strided_slice %20 {offsets = [0, 28], sizes = [8, 4], strides = [1, 1]} : vector<8x32xf32> to vector<8x4xf32>
    %22 = vector.extract_strided_slice %20 {offsets = [0, 0], sizes = [8, 28], strides = [1, 1]} : vector<8x32xf32> to vector<8x28xf32>
    %23 = tpu.concatenate %21, %22 in 1 : vector<8x4xf32>, vector<8x28xf32> -> vector<8x32xf32>
    %24 = vector.extract_strided_slice %23 {offsets = [6, 0], sizes = [2, 32], strides = [1, 1]} : vector<8x32xf32> to vector<2x32xf32>
    %25 = vector.extract_strided_slice %23 {offsets = [0, 0], sizes = [6, 32], strides = [1, 1]} : vector<8x32xf32> to vector<6x32xf32>
    %26 = tpu.concatenate %24, %25 in 0 : vector<2x32xf32>, vector<6x32xf32> -> vector<8x32xf32>
    %27 = vector.extract_strided_slice %26 {offsets = [1, 0], sizes = [7, 32], strides = [1, 1]} : vector<8x32xf32> to vector<7x32xf32>
    %28 = vector.extract_strided_slice %26 {offsets = [0, 0], sizes = [1, 32], strides = [1, 1]} : vector<8x32xf32> to vector<1x32xf32>
    %29 = tpu.concatenate %27, %28 in 0 : vector<7x32xf32>, vector<1x32xf32> -> vector<8x32xf32>
    %30 = tpu.iota {dimensions = array<i32: 1>} : vector<8x32xi32>
    %c4_i32 = arith.constant 4 : i32
    %31 = vector.broadcast %c4_i32 : i32 to vector<8x32xi32>
    %32 = arith.cmpi slt, %30, %31 : vector<8x32xi32>
    %33 = arith.select %32, %26, %29 : vector<8x32xi1>, vector<8x32xf32>
    %34 = arith.truncf %33 : vector<8x32xf32> to vector<8x32xbf16>
    %c0_6 = arith.constant 0 : index
    %c0_7 = arith.constant 0 : index
    %c0_8 = arith.constant 0 : index
    %35 = vector.load %arg2[%c0_6, %c0_7, %c0_8] : memref<9x32x128xbf16, #tpu.memory_space<vmem>>, vector<1x32x128xbf16>
    %36 = vector.shape_cast %35 : vector<1x32x128xbf16> to vector<32x128xbf16>
    %cst_9 = arith.constant dense<0.000000e+00> : vector<8x128xf32>
    %37 = tpu.matmul %34, %36, %cst_9 {dimension_numbers = #tpu.dot_dimension_numbers<[1], [0], [0], [1], [0, 0, 1, 1], [], []>} : vector<8x32xbf16>, vector<32x128xbf16>, vector<8x128xf32> -> vector<8x128xf32>
    %38 = arith.addf %0, %37 : vector<8x128xf32>
    %c7_i32_10 = arith.constant 7 : i32
    %39 = vector.broadcast %c7_i32_10 : i32 to vector<8x32xi32>
    %40 = arith.cmpi slt, %11, %39 : vector<8x32xi32>
    %cst_11 = arith.constant 0.000000e+00 : f32
    %41 = vector.broadcast %cst_11 : f32 to vector<8x32xf32>
    %42 = arith.select %40, %2, %41 : vector<8x32xi1>, vector<8x32xf32>
    %43 = vector.extract_strided_slice %42 {offsets = [7, 0], sizes = [1, 32], strides = [1, 1]} : vector<8x32xf32> to vector<1x32xf32>
    %44 = vector.extract_strided_slice %42 {offsets = [0, 0], sizes = [7, 32], strides = [1, 1]} : vector<8x32xf32> to vector<7x32xf32>
    %45 = tpu.concatenate %43, %44 in 0 : vector<1x32xf32>, vector<7x32xf32> -> vector<8x32xf32>
    %46 = arith.truncf %45 : vector<8x32xf32> to vector<8x32xbf16>
    %c1 = arith.constant 1 : index
    %c0_12 = arith.constant 0 : index
    %c0_13 = arith.constant 0 : index
    %47 = vector.load %arg2[%c1, %c0_12, %c0_13] : memref<9x32x128xbf16, #tpu.memory_space<vmem>>, vector<1x32x128xbf16>
    %48 = vector.shape_cast %47 : vector<1x32x128xbf16> to vector<32x128xbf16>
    %cst_14 = arith.constant dense<0.000000e+00> : vector<8x128xf32>
    %49 = tpu.matmul %46, %48, %cst_14 {dimension_numbers = #tpu.dot_dimension_numbers<[1], [0], [0], [1], [0, 0, 1, 1], [], []>} : vector<8x32xbf16>, vector<32x128xbf16>, vector<8x128xf32> -> vector<8x128xf32>
    %50 = arith.addf %38, %49 : vector<8x128xf32>
    %c7_i32_15 = arith.constant 7 : i32
    %51 = vector.broadcast %c7_i32_15 : i32 to vector<8x32xi32>
    %52 = arith.cmpi slt, %11, %51 : vector<8x32xi32>
    %c1_i32 = arith.constant 1 : i32
    %53 = vector.broadcast %c1_i32 : i32 to vector<8x32xi32>
    %54 = arith.cmpi sge, %13, %53 : vector<8x32xi32>
    %55 = arith.andi %52, %54 : vector<8x32xi1>
    %cst_16 = arith.constant 0.000000e+00 : f32
    %56 = vector.broadcast %cst_16 : f32 to vector<8x32xf32>
    %57 = arith.select %55, %2, %56 : vector<8x32xi1>, vector<8x32xf32>
    %58 = vector.extract_strided_slice %57 {offsets = [0, 4], sizes = [8, 28], strides = [1, 1]} : vector<8x32xf32> to vector<8x28xf32>
    %59 = vector.extract_strided_slice %57 {offsets = [0, 0], sizes = [8, 4], strides = [1, 1]} : vector<8x32xf32> to vector<8x4xf32>
    %60 = tpu.concatenate %58, %59 in 1 : vector<8x28xf32>, vector<8x4xf32> -> vector<8x32xf32>
    %61 = vector.extract_strided_slice %60 {offsets = [7, 0], sizes = [1, 32], strides = [1, 1]} : vector<8x32xf32> to vector<1x32xf32>
    %62 = vector.extract_strided_slice %60 {offsets = [0, 0], sizes = [7, 32], strides = [1, 1]} : vector<8x32xf32> to vector<7x32xf32>
    %63 = tpu.concatenate %61, %62 in 0 : vector<1x32xf32>, vector<7x32xf32> -> vector<8x32xf32>
    %64 = vector.extract_strided_slice %63 {offsets = [1, 0], sizes = [7, 32], strides = [1, 1]} : vector<8x32xf32> to vector<7x32xf32>
    %65 = vector.extract_strided_slice %63 {offsets = [0, 0], sizes = [1, 32], strides = [1, 1]} : vector<8x32xf32> to vector<1x32xf32>
    %66 = tpu.concatenate %64, %65 in 0 : vector<7x32xf32>, vector<1x32xf32> -> vector<8x32xf32>
    %67 = tpu.iota {dimensions = array<i32: 1>} : vector<8x32xi32>
    %c28_i32 = arith.constant 28 : i32
    %68 = vector.broadcast %c28_i32 : i32 to vector<8x32xi32>
    %69 = arith.cmpi slt, %67, %68 : vector<8x32xi32>
    %70 = arith.select %69, %63, %66 : vector<8x32xi1>, vector<8x32xf32>
    %71 = arith.truncf %70 : vector<8x32xf32> to vector<8x32xbf16>
    %c2 = arith.constant 2 : index
    %c0_17 = arith.constant 0 : index
    %c0_18 = arith.constant 0 : index
    %72 = vector.load %arg2[%c2, %c0_17, %c0_18] : memref<9x32x128xbf16, #tpu.memory_space<vmem>>, vector<1x32x128xbf16>
    %73 = vector.shape_cast %72 : vector<1x32x128xbf16> to vector<32x128xbf16>
    %cst_19 = arith.constant dense<0.000000e+00> : vector<8x128xf32>
    %74 = tpu.matmul %71, %73, %cst_19 {dimension_numbers = #tpu.dot_dimension_numbers<[1], [0], [0], [1], [0, 0, 1, 1], [], []>} : vector<8x32xbf16>, vector<32x128xbf16>, vector<8x128xf32> -> vector<8x128xf32>
    %75 = arith.addf %50, %74 : vector<8x128xf32>
    %c7_i32_20 = arith.constant 7 : i32
    %76 = vector.broadcast %c7_i32_20 : i32 to vector<8x32xi32>
    %77 = arith.cmpi slt, %13, %76 : vector<8x32xi32>
    %cst_21 = arith.constant 0.000000e+00 : f32
    %78 = vector.broadcast %cst_21 : f32 to vector<8x32xf32>
    %79 = arith.select %77, %2, %78 : vector<8x32xi1>, vector<8x32xf32>
    %80 = vector.extract_strided_slice %79 {offsets = [0, 28], sizes = [8, 4], strides = [1, 1]} : vector<8x32xf32> to vector<8x4xf32>
    %81 = vector.extract_strided_slice %79 {offsets = [0, 0], sizes = [8, 28], strides = [1, 1]} : vector<8x32xf32> to vector<8x28xf32>
    %82 = tpu.concatenate %80, %81 in 1 : vector<8x4xf32>, vector<8x28xf32> -> vector<8x32xf32>
    %83 = vector.extract_strided_slice %82 {offsets = [7, 0], sizes = [1, 32], strides = [1, 1]} : vector<8x32xf32> to vector<1x32xf32>
    %84 = vector.extract_strided_slice %82 {offsets = [0, 0], sizes = [7, 32], strides = [1, 1]} : vector<8x32xf32> to vector<7x32xf32>
    %85 = tpu.concatenate %83, %84 in 0 : vector<1x32xf32>, vector<7x32xf32> -> vector<8x32xf32>
    %86 = vector.extract_strided_slice %85 {offsets = [1, 0], sizes = [7, 32], strides = [1, 1]} : vector<8x32xf32> to vector<7x32xf32>
    %87 = vector.extract_strided_slice %85 {offsets = [0, 0], sizes = [1, 32], strides = [1, 1]} : vector<8x32xf32> to vector<1x32xf32>
    %88 = tpu.concatenate %86, %87 in 0 : vector<7x32xf32>, vector<1x32xf32> -> vector<8x32xf32>
    %89 = tpu.iota {dimensions = array<i32: 1>} : vector<8x32xi32>
    %c4_i32_22 = arith.constant 4 : i32
    %90 = vector.broadcast %c4_i32_22 : i32 to vector<8x32xi32>
    %91 = arith.cmpi slt, %89, %90 : vector<8x32xi32>
    %92 = arith.select %91, %85, %88 : vector<8x32xi1>, vector<8x32xf32>
    %93 = arith.truncf %92 : vector<8x32xf32> to vector<8x32xbf16>
    %c3 = arith.constant 3 : index
    %c0_23 = arith.constant 0 : index
    %c0_24 = arith.constant 0 : index
    %94 = vector.load %arg2[%c3, %c0_23, %c0_24] : memref<9x32x128xbf16, #tpu.memory_space<vmem>>, vector<1x32x128xbf16>
    %95 = vector.shape_cast %94 : vector<1x32x128xbf16> to vector<32x128xbf16>
    %cst_25 = arith.constant dense<0.000000e+00> : vector<8x128xf32>
    %96 = tpu.matmul %93, %95, %cst_25 {dimension_numbers = #tpu.dot_dimension_numbers<[1], [0], [0], [1], [0, 0, 1, 1], [], []>} : vector<8x32xbf16>, vector<32x128xbf16>, vector<8x128xf32> -> vector<8x128xf32>
    %97 = arith.addf %75, %96 : vector<8x128xf32>
    %98 = arith.truncf %2 : vector<8x32xf32> to vector<8x32xbf16>
    %c4 = arith.constant 4 : index
    %c0_26 = arith.constant 0 : index
    %c0_27 = arith.constant 0 : index
    %99 = vector.load %arg2[%c4, %c0_26, %c0_27] : memref<9x32x128xbf16, #tpu.memory_space<vmem>>, vector<1x32x128xbf16>
    %100 = vector.shape_cast %99 : vector<1x32x128xbf16> to vector<32x128xbf16>
    %cst_28 = arith.constant dense<0.000000e+00> : vector<8x128xf32>
    %101 = tpu.matmul %98, %100, %cst_28 {dimension_numbers = #tpu.dot_dimension_numbers<[1], [0], [0], [1], [0, 0, 1, 1], [], []>} : vector<8x32xbf16>, vector<32x128xbf16>, vector<8x128xf32> -> vector<8x128xf32>
    %102 = arith.addf %97, %101 : vector<8x128xf32>
    %c1_i32_29 = arith.constant 1 : i32
    %103 = vector.broadcast %c1_i32_29 : i32 to vector<8x32xi32>
    %104 = arith.cmpi sge, %13, %103 : vector<8x32xi32>
    %cst_30 = arith.constant 0.000000e+00 : f32
    %105 = vector.broadcast %cst_30 : f32 to vector<8x32xf32>
    %106 = arith.select %104, %2, %105 : vector<8x32xi1>, vector<8x32xf32>
    %107 = vector.extract_strided_slice %106 {offsets = [0, 4], sizes = [8, 28], strides = [1, 1]} : vector<8x32xf32> to vector<8x28xf32>
    %108 = vector.extract_strided_slice %106 {offsets = [0, 0], sizes = [8, 4], strides = [1, 1]} : vector<8x32xf32> to vector<8x4xf32>
    %109 = tpu.concatenate %107, %108 in 1 : vector<8x28xf32>, vector<8x4xf32> -> vector<8x32xf32>
    %110 = vector.extract_strided_slice %109 {offsets = [1, 0], sizes = [7, 32], strides = [1, 1]} : vector<8x32xf32> to vector<7x32xf32>
    %111 = vector.extract_strided_slice %109 {offsets = [0, 0], sizes = [1, 32], strides = [1, 1]} : vector<8x32xf32> to vector<1x32xf32>
    %112 = tpu.concatenate %110, %111 in 0 : vector<7x32xf32>, vector<1x32xf32> -> vector<8x32xf32>
    %113 = tpu.iota {dimensions = array<i32: 1>} : vector<8x32xi32>
    %c28_i32_31 = arith.constant 28 : i32
    %114 = vector.broadcast %c28_i32_31 : i32 to vector<8x32xi32>
    %115 = arith.cmpi slt, %113, %114 : vector<8x32xi32>
    %116 = arith.select %115, %109, %112 : vector<8x32xi1>, vector<8x32xf32>
    %117 = arith.truncf %116 : vector<8x32xf32> to vector<8x32xbf16>
    %c5 = arith.constant 5 : index
    %c0_32 = arith.constant 0 : index
    %c0_33 = arith.constant 0 : index
    %118 = vector.load %arg2[%c5, %c0_32, %c0_33] : memref<9x32x128xbf16, #tpu.memory_space<vmem>>, vector<1x32x128xbf16>
    %119 = vector.shape_cast %118 : vector<1x32x128xbf16> to vector<32x128xbf16>
    %cst_34 = arith.constant dense<0.000000e+00> : vector<8x128xf32>
    %120 = tpu.matmul %117, %119, %cst_34 {dimension_numbers = #tpu.dot_dimension_numbers<[1], [0], [0], [1], [0, 0, 1, 1], [], []>} : vector<8x32xbf16>, vector<32x128xbf16>, vector<8x128xf32> -> vector<8x128xf32>
    %121 = arith.addf %102, %120 : vector<8x128xf32>
    %c1_i32_35 = arith.constant 1 : i32
    %122 = vector.broadcast %c1_i32_35 : i32 to vector<8x32xi32>
    %123 = arith.cmpi sge, %11, %122 : vector<8x32xi32>
    %c7_i32_36 = arith.constant 7 : i32
    %124 = vector.broadcast %c7_i32_36 : i32 to vector<8x32xi32>
    %125 = arith.cmpi slt, %13, %124 : vector<8x32xi32>
    %126 = arith.andi %123, %125 : vector<8x32xi1>
    %cst_37 = arith.constant 0.000000e+00 : f32
    %127 = vector.broadcast %cst_37 : f32 to vector<8x32xf32>
    %128 = arith.select %126, %2, %127 : vector<8x32xi1>, vector<8x32xf32>
    %129 = vector.extract_strided_slice %128 {offsets = [0, 28], sizes = [8, 4], strides = [1, 1]} : vector<8x32xf32> to vector<8x4xf32>
    %130 = vector.extract_strided_slice %128 {offsets = [0, 0], sizes = [8, 28], strides = [1, 1]} : vector<8x32xf32> to vector<8x28xf32>
    %131 = tpu.concatenate %129, %130 in 1 : vector<8x4xf32>, vector<8x28xf32> -> vector<8x32xf32>
    %132 = vector.extract_strided_slice %131 {offsets = [1, 0], sizes = [7, 32], strides = [1, 1]} : vector<8x32xf32> to vector<7x32xf32>
    %133 = vector.extract_strided_slice %131 {offsets = [0, 0], sizes = [1, 32], strides = [1, 1]} : vector<8x32xf32> to vector<1x32xf32>
    %134 = tpu.concatenate %132, %133 in 0 : vector<7x32xf32>, vector<1x32xf32> -> vector<8x32xf32>
    %135 = tpu.iota {dimensions = array<i32: 1>} : vector<8x32xi32>
    %c4_i32_38 = arith.constant 4 : i32
    %136 = vector.broadcast %c4_i32_38 : i32 to vector<8x32xi32>
    %137 = arith.cmpi slt, %135, %136 : vector<8x32xi32>
    %138 = arith.select %137, %131, %134 : vector<8x32xi1>, vector<8x32xf32>
    %139 = arith.truncf %138 : vector<8x32xf32> to vector<8x32xbf16>
    %c6 = arith.constant 6 : index
    %c0_39 = arith.constant 0 : index
    %c0_40 = arith.constant 0 : index
    %140 = vector.load %arg2[%c6, %c0_39, %c0_40] : memref<9x32x128xbf16, #tpu.memory_space<vmem>>, vector<1x32x128xbf16>
    %141 = vector.shape_cast %140 : vector<1x32x128xbf16> to vector<32x128xbf16>
    %cst_41 = arith.constant dense<0.000000e+00> : vector<8x128xf32>
    %142 = tpu.matmul %139, %141, %cst_41 {dimension_numbers = #tpu.dot_dimension_numbers<[1], [0], [0], [1], [0, 0, 1, 1], [], []>} : vector<8x32xbf16>, vector<32x128xbf16>, vector<8x128xf32> -> vector<8x128xf32>
    %143 = arith.addf %121, %142 : vector<8x128xf32>
    %c1_i32_42 = arith.constant 1 : i32
    %144 = vector.broadcast %c1_i32_42 : i32 to vector<8x32xi32>
    %145 = arith.cmpi sge, %11, %144 : vector<8x32xi32>
    %cst_43 = arith.constant 0.000000e+00 : f32
    %146 = vector.broadcast %cst_43 : f32 to vector<8x32xf32>
    %147 = arith.select %145, %2, %146 : vector<8x32xi1>, vector<8x32xf32>
    %148 = vector.extract_strided_slice %147 {offsets = [1, 0], sizes = [7, 32], strides = [1, 1]} : vector<8x32xf32> to vector<7x32xf32>
    %149 = vector.extract_strided_slice %147 {offsets = [0, 0], sizes = [1, 32], strides = [1, 1]} : vector<8x32xf32> to vector<1x32xf32>
    %150 = tpu.concatenate %148, %149 in 0 : vector<7x32xf32>, vector<1x32xf32> -> vector<8x32xf32>
    %151 = arith.truncf %150 : vector<8x32xf32> to vector<8x32xbf16>
    %c7 = arith.constant 7 : index
    %c0_44 = arith.constant 0 : index
    %c0_45 = arith.constant 0 : index
    %152 = vector.load %arg2[%c7, %c0_44, %c0_45] : memref<9x32x128xbf16, #tpu.memory_space<vmem>>, vector<1x32x128xbf16>
    %153 = vector.shape_cast %152 : vector<1x32x128xbf16> to vector<32x128xbf16>
    %cst_46 = arith.constant dense<0.000000e+00> : vector<8x128xf32>
    %154 = tpu.matmul %151, %153, %cst_46 {dimension_numbers = #tpu.dot_dimension_numbers<[1], [0], [0], [1], [0, 0, 1, 1], [], []>} : vector<8x32xbf16>, vector<32x128xbf16>, vector<8x128xf32> -> vector<8x128xf32>
    %155 = arith.addf %143, %154 : vector<8x128xf32>
    %c1_i32_47 = arith.constant 1 : i32
    %156 = vector.broadcast %c1_i32_47 : i32 to vector<8x32xi32>
    %157 = arith.cmpi sge, %11, %156 : vector<8x32xi32>
    %c1_i32_48 = arith.constant 1 : i32
    %158 = vector.broadcast %c1_i32_48 : i32 to vector<8x32xi32>
    %159 = arith.cmpi sge, %13, %158 : vector<8x32xi32>
    %160 = arith.andi %157, %159 : vector<8x32xi1>
    %cst_49 = arith.constant 0.000000e+00 : f32
    %161 = vector.broadcast %cst_49 : f32 to vector<8x32xf32>
    %162 = arith.select %160, %2, %161 : vector<8x32xi1>, vector<8x32xf32>
    %163 = vector.extract_strided_slice %162 {offsets = [0, 4], sizes = [8, 28], strides = [1, 1]} : vector<8x32xf32> to vector<8x28xf32>
    %164 = vector.extract_strided_slice %162 {offsets = [0, 0], sizes = [8, 4], strides = [1, 1]} : vector<8x32xf32> to vector<8x4xf32>
    %165 = tpu.concatenate %163, %164 in 1 : vector<8x28xf32>, vector<8x4xf32> -> vector<8x32xf32>
    %166 = vector.extract_strided_slice %165 {offsets = [1, 0], sizes = [7, 32], strides = [1, 1]} : vector<8x32xf32> to vector<7x32xf32>
    %167 = vector.extract_strided_slice %165 {offsets = [0, 0], sizes = [1, 32], strides = [1, 1]} : vector<8x32xf32> to vector<1x32xf32>
    %168 = tpu.concatenate %166, %167 in 0 : vector<7x32xf32>, vector<1x32xf32> -> vector<8x32xf32>
    %169 = vector.extract_strided_slice %168 {offsets = [1, 0], sizes = [7, 32], strides = [1, 1]} : vector<8x32xf32> to vector<7x32xf32>
    %170 = vector.extract_strided_slice %168 {offsets = [0, 0], sizes = [1, 32], strides = [1, 1]} : vector<8x32xf32> to vector<1x32xf32>
    %171 = tpu.concatenate %169, %170 in 0 : vector<7x32xf32>, vector<1x32xf32> -> vector<8x32xf32>
    %172 = tpu.iota {dimensions = array<i32: 1>} : vector<8x32xi32>
    %c28_i32_50 = arith.constant 28 : i32
    %173 = vector.broadcast %c28_i32_50 : i32 to vector<8x32xi32>
    %174 = arith.cmpi slt, %172, %173 : vector<8x32xi32>
    %175 = arith.select %174, %168, %171 : vector<8x32xi1>, vector<8x32xf32>
    %176 = arith.truncf %175 : vector<8x32xf32> to vector<8x32xbf16>
    %c8 = arith.constant 8 : index
    %c0_51 = arith.constant 0 : index
    %c0_52 = arith.constant 0 : index
    %177 = vector.load %arg2[%c8, %c0_51, %c0_52] : memref<9x32x128xbf16, #tpu.memory_space<vmem>>, vector<1x32x128xbf16>
    %178 = vector.shape_cast %177 : vector<1x32x128xbf16> to vector<32x128xbf16>
    %cst_53 = arith.constant dense<0.000000e+00> : vector<8x128xf32>
    %179 = tpu.matmul %176, %178, %cst_53 {dimension_numbers = #tpu.dot_dimension_numbers<[1], [0], [0], [1], [0, 0, 1, 1], [], []>} : vector<8x32xbf16>, vector<32x128xbf16>, vector<8x128xf32> -> vector<8x128xf32>
    %180 = arith.addf %155, %179 : vector<8x128xf32>
    %c0_54 = arith.constant 0 : index
    %c0_55 = arith.constant 0 : index
    %181 = vector.load %arg3[%c0_54, %c0_55] : memref<1x128xf32, #tpu.memory_space<vmem>>, vector<1x128xf32>
    %182 = vector.broadcast %181 : vector<1x128xf32> to vector<8x128xf32>
    %183 = arith.addf %180, %182 : vector<8x128xf32>
    %cst_56 = arith.constant 0.000000e+00 : f32
    %184 = vector.broadcast %cst_56 : f32 to vector<8x128xf32>
    %185 = arith.maximumf %183, %184 : vector<8x128xf32>
    %c0_57 = arith.constant 0 : index
    %c0_58 = arith.constant 0 : index
    %c0_59 = arith.constant 0 : index
    %186 = vector.load %arg4[%c0_57, %c0_58, %c0_59] : memref<1x8x128xf32, #tpu.memory_space<vmem>>, vector<1x8x128xf32>
    %187 = vector.shape_cast %186 : vector<1x8x128xf32> to vector<8x128xf32>
    %188 = vector.shape_cast %185 : vector<8x128xf32> to vector<1x8x128xf32>
    tpu.vector_store %arg4[%c0_57, %c0_58, %c0_59], %188 {strides = array<i32>} : memref<1x8x128xf32, #tpu.memory_space<vmem>>, vector<1x8x128xf32>,
    return
  }
  func.func @transform_0(%arg0: i32) -> (i32, i32, i32) {
    %c0_i32 = arith.constant 0 : i32
    %c0_i32_0 = arith.constant 0 : i32
    %c0_i32_1 = arith.constant 0 : i32
    return %arg0, %c0_i32, %c0_i32_0 : i32, i32, i32
  }
  func.func @transform_1(%arg0: i32) -> (i32, i32, i32) {
    %c0_i32 = arith.constant 0 : i32
    %c0_i32_0 = arith.constant 0 : i32
    %c0_i32_1 = arith.constant 0 : i32
    %c0_i32_2 = arith.constant 0 : i32
    return %c0_i32, %c0_i32_0, %c0_i32_1 : i32, i32, i32
  }
  func.func @transform_2(%arg0: i32) -> (i32, i32) {
    %c0_i32 = arith.constant 0 : i32
    %c0_i32_0 = arith.constant 0 : i32
    %c0_i32_1 = arith.constant 0 : i32
    return %c0_i32, %c0_i32_0 : i32, i32
  }
  func.func @transform_3(%arg0: i32) -> (i32, i32, i32) {
    %c0_i32 = arith.constant 0 : i32
    %c0_i32_0 = arith.constant 0 : i32
    %c0_i32_1 = arith.constant 0 : i32
    return %arg0, %c0_i32, %c0_i32_0 : i32, i32, i32
  }
}

</mosaic_0001>

<llo_original>
// kernel: tpu_custom_call.1
$region0: #{tpu_custom_call.1}
  #allocation0 [shape = 'u32[]', space=smem, size = 0x4, offset = 0x4, fixed_abs, tag = 'smem constant byte address 0x4 - core index']
  #allocation1 [shape = 'u32[144,128]{1,0:T(1,128)}', space=vmem, size = 0x12000, scoped, tag = 'internal scratch']
  %s0 = inlined_call_operand.hbm [shape: f32[2,8,32], index: 0, kind: input, shape index: {}]
  %s1 = inlined_call_operand.hbm [shape: bf16[9,32,128], index: 1, kind: input, shape index: {}]
  %s2 = inlined_call_operand.vmem [shape: f32[1,128], index: 2, kind: input, shape index: {}]
  %s3 = inlined_call_operand.hbm [shape: f32[2,8,128], index: 3, kind: output, shape index: {}]
  %s4 = sld [smem:[#allocation0]]
  $region53: #{tpu_custom_call.1} parent=0
    _
  %s6 = ssub.s32 1, %s4
  %s7 = scalar_select 0, %s6, %s4
  $region1: #{tpu_custom_call.1} parent=0
    #allocation2 [shape = 'u8[8192]{0}', space=vmem, size = 0x2000, scoped, tag = 'input window, operand 0']
    #allocation3 [shape = 's32[2]{0}', space=sflag, size = 0x8, scoped, tag = 'scoped memory for tpu_custom_call.1']
    #allocation4 [shape = 's32[2]{0}', space=sflag, size = 0x8, scoped, tag = 'scoped memory for tpu_custom_call.1']
    #allocation5 [shape = 'u8[73728]{0}', space=vmem, size = 0x12000, scoped, tag = 'input window, operand 1, single buffered']
    #allocation6 [shape = 's32[1]{0}', space=sflag, size = 0x4, scoped, tag = 'scoped memory for tpu_custom_call.1']
    #allocation7 [shape = 'u8[8192]{0}', space=vmem, size = 0x2000, scoped, tag = 'output window, operand 0']
    %8 = vsyncpa [#allocation3], 0
    %s9 = scalar_lea.sflag [#allocation3], 1
    %10 = vsyncpa %s9, 0
    %11 = vsyncpa [#allocation6], 0
    %12 = vsyncpa [#allocation4], 0
    %s13 = scalar_lea.sflag [#allocation4], 1
    %14 = vsyncpa %s13, 0
    loop: start=0, step=1, limit=4
    $region2: #{tpu_custom_call.1} parent=1 // loop_pre_header
      _
    $region3: #{tpu_custom_call.1} parent=1 // loop_header
      %s16 = sphi 0, %s20
      %p17 = scmp.ge.s32.totalorder %s16, 4
      %s26 = sphi 0, %s28
      %s29 = sphi 0, %s26
      %s30 = sphi 0, %s29
      %s46 = sphi 0, %s30
      %s50 = sphi 0, %s50
      %s52 = sphi 0, %s50
      %s53 = sphi 0, %s52
      %s67 = sphi 0, %s53
      %s71 = sphi 0, %s71
      %s73 = sphi 0, %s71
      %s74 = sphi 0, %s73
      %s88 = sphi 0, %s74
      %s94 = sphi 0, %s96
      %s97 = sphi 0, %s94
      %s98 = sphi 0, %s97
      %s114 = sphi 0, %s98
    $region4: #{tpu_custom_call.1} parent=1 // loop_header_branch
      %19 = sbr.rel (%p17) target = $region8
    $region5: #{tpu_custom_call.1} parent=1 // loop_body
      %s21 = ssub.s32 %s16, 1
      %s22 = ssub.s32 %s16, 2
      %s23 = sadd.s32 %s16, 1
      %s24 = ssub.s32 %s16, %s23
      %p25 = scmp.eq.s32.totalorder %s24, 0
      %s27 = sadd.s32 %s26, 1
      %s28 = scalar_select %p25, %s26, %s27
      %p31 = pneg %p25
      %p32 = scmp.eq.s32.totalorder %s16, 1
      %p33 = por %p31, %p32
      %p34 = scmp.ne.s32.totalorder %s26, %s29
      %p35 = scmp.eq.s32.totalorder %s16, 0
      %p36 = por %p34, %p35
      %p37 = scmp.ne.s32.totalorder %s26, %s29
      %p38 = scmp.eq.s32.totalorder %s21, 1
      %p39 = por %p37, %p38
      %p40 = scmp.ne.s32.totalorder %s29, %s30
      %p41 = scmp.eq.s32.totalorder %s21, 0
      %p42 = por %p40, %p41
      %p43 = scmp.ne.s32.totalorder %s29, %s30
      %p44 = scmp.eq.s32.totalorder %s22, 1
      %p45 = por %p43, %p44
      %p47 = scmp.ne.s32.totalorder %s30, %s46
      %p48 = scmp.eq.s32.totalorder %s22, 0
      %p49 = por %p47, %p48
      %s51 = sadd.s32 %s50, 1
      %p54 = scmp.eq.s32.totalorder %s16, 1
      %p55 = scmp.ne.s32.totalorder %s50, %s52
      %p56 = scmp.eq.s32.totalorder %s16, 0
      %p57 = por %p55, %p56
      %p58 = scmp.ne.s32.totalorder %s50, %s52
      %p59 = scmp.eq.s32.totalorder %s21, 1
      %p60 = por %p58, %p59
      %p61 = scmp.ne.s32.totalorder %s52, %s53
      %p62 = scmp.eq.s32.totalorder %s21, 0
      %p63 = por %p61, %p62
      %p64 = scmp.ne.s32.totalorder %s52, %s53
      %p65 = scmp.eq.s32.totalorder %s22, 1
      %p66 = por %p64, %p65
      %p68 = scmp.ne.s32.totalorder %s53, %s67
      %p69 = scmp.eq.s32.totalorder %s22, 0
      %p70 = por %p68, %p69
      %s72 = sadd.s32 %s71, 1
      %p75 = scmp.eq.s32.totalorder %s16, 1
      %p76 = scmp.ne.s32.totalorder %s71, %s73
      %p77 = scmp.eq.s32.totalorder %s16, 0
      %p78 = por %p76, %p77
      %p79 = scmp.ne.s32.totalorder %s71, %s73
      %p80 = scmp.eq.s32.totalorder %s21, 1
      %p81 = por %p79, %p80
      %p82 = scmp.ne.s32.totalorder %s73, %s74
      %p83 = scmp.eq.s32.totalorder %s21, 0
      %p84 = por %p82, %p83
      %p85 = scmp.ne.s32.totalorder %s73, %s74
      %p86 = scmp.eq.s32.totalorder %s22, 1
      %p87 = por %p85, %p86
      %p89 = scmp.ne.s32.totalorder %s74, %s88
      %p90 = scmp.eq.s32.totalorder %s22, 0
      %p91 = por %p89, %p90
      %s92 = ssub.s32 %s16, %s23
      %p93 = scmp.eq.s32.totalorder %s92, 0
      %s95 = sadd.s32 %s94, 1
      %s96 = scalar_select %p93, %s94, %s95
      %p99 = pneg %p93
      %p100 = scmp.eq.s32.totalorder %s16, 1
      %p101 = por %p99, %p100
      %p102 = scmp.ne.s32.totalorder %s94, %s97
      %p103 = scmp.eq.s32.totalorder %s16, 0
      %p104 = por %p102, %p103
      %p105 = scmp.ne.s32.totalorder %s94, %s97
      %p106 = scmp.eq.s32.totalorder %s21, 1
      %p107 = por %p105, %p106
      %p108 = scmp.ne.s32.totalorder %s97, %s98
      %p109 = scmp.eq.s32.totalorder %s21, 0
      %p110 = por %p108, %p109
      %p111 = scmp.ne.s32.totalorder %s97, %s98
      %p112 = scmp.eq.s32.totalorder %s22, 1
      %p113 = por %p111, %p112
      %p115 = scmp.ne.s32.totalorder %s98, %s114
      %p116 = scmp.eq.s32.totalorder %s22, 0
      %p117 = por %p115, %p116
      %p118 = scmp.le.s32.totalorder 1, %s16
      %p119 = scmp.lt.s32.totalorder %s16, 3
      %p120 = pnand %p118, %p119
      %p121 = pneg %p120
      // Predicated region
      $region9: #{tpu_custom_call.1} parent=5 // pred_check
        _
      $region10: #{tpu_custom_call.1} parent=5 // pred_check_branch
        %123 = sbr.rel (%p120) target = $region12
      $region11: #{tpu_custom_call.1} parent=5 // pred_region
        %s124 = ssub.s32 %s16, 1
        // Predicated region
        $region13: #{tpu_custom_call.1} parent=11 // pred_check
          %p125 = pneg %p63
        $region14: #{tpu_custom_call.1} parent=11 // pred_check_branch
          %127 = sbr.rel (%p125) target = $region16
        $region15: #{tpu_custom_call.1} parent=11 // pred_region
          %s129 = ssub.s32 2304, 2304
          %130 = vsyncadd [#allocation6], %s129
          %s131 = sshll.u32 [#allocation5], 4
          %s132 = int_to_ptr.vmem [resolvable:$true] %s131
          %137 = dma.hbm_to_vmem [thread:$0]  %s1, 2304, %s132, [#allocation6], 64, 64, 4
        $region16: #{tpu_custom_call.1} parent=11 // pred_fallthru
          _
        // Predicated region
        $region17: #{tpu_custom_call.1} parent=11 // pred_check
          %p138 = pneg %p84
        $region18: #{tpu_custom_call.1} parent=11 // pred_check_branch
          %140 = sbr.rel (%p138) target = $region20
        $region19: #{tpu_custom_call.1} parent=11 // pred_region
          _
        $region20: #{tpu_custom_call.1} parent=11 // pred_fallthru
          _
      $region12: #{tpu_custom_call.1} parent=5 // pred_fallthru
        _
      %p141 = scmp.lt.s32.totalorder %s16, 2
      // Predicated region
      $region21: #{tpu_custom_call.1} parent=5 // pred_check
        %p142 = pneg %p141
      $region22: #{tpu_custom_call.1} parent=5 // pred_check_branch
        %144 = sbr.rel (%p142) target = $region24
      $region23: #{tpu_custom_call.1} parent=5 // pred_region
        // Predicated region
        $region25: #{tpu_custom_call.1} parent=23 // pred_check
          %p145 = pneg %p36
        $region26: #{tpu_custom_call.1} parent=23 // pred_check_branch
          %147 = sbr.rel (%p145) target = $region28
        $region27: #{tpu_custom_call.1} parent=23 // pred_region
          %s148 = sand.u32 %s26, 1
          %s149 = scalar_lea.sflag [#allocation3], %s148
          %s150 = sand.u32 %s26, 1
          %s151 = smul.addr %s150, 8
          %s152 = scalar_lea.vmem [#allocation2], %s151
          %s154 = ssub.s32 128, 128
          %155 = vsyncadd %s149, %s154
          %s156 = smul.addr %s16, 128
          %s157 = scalar_lea.hbm %s0, %s156
          %s159 = sshll.u32 %s152, 4
          %s160 = int_to_ptr.vmem [resolvable:$true] %s159
          %162 = dma.hbm_to_vmem [thread:$0]  %s157, 128, %s160, %s149
        $region28: #{tpu_custom_call.1} parent=23 // pred_fallthru
          _
      $region24: #{tpu_custom_call.1} parent=5 // pred_fallthru
        _
      %p163 = scmp.le.s32.totalorder 1, %s16
      %p164 = scmp.lt.s32.totalorder %s16, 3
      %p165 = pnand %p163, %p164
      %p166 = pneg %p165
      // Predicated region
      $region29: #{tpu_custom_call.1} parent=5 // pred_check
        _
      $region30: #{tpu_custom_call.1} parent=5 // pred_check_branch
        %168 = sbr.rel (%p165) target = $region32
      $region31: #{tpu_custom_call.1} parent=5 // pred_region
        %s169 = ssub.s32 %s16, 1
        %s170 = sand.u32 %s29, 1
        %s171 = scalar_lea.sflag [#allocation3], %s170
        %s172 = sand.u32 %s29, 1
        %s173 = smul.addr %s172, 8
        %s174 = scalar_lea.vmem [#allocation2], %s173
        // Predicated region
        $region33: #{tpu_custom_call.1} parent=31 // pred_check
          %p175 = pneg %p42
        $region34: #{tpu_custom_call.1} parent=31 // pred_check_branch
          %177 = sbr.rel (%p175) target = $region36
        $region35: #{tpu_custom_call.1} parent=31 // pred_region
          %178 = dma.done %s171, 128
        $region36: #{tpu_custom_call.1} parent=31 // pred_fallthru
          _
        // Predicated region
        $region37: #{tpu_custom_call.1} parent=31 // pred_check
          %p179 = pneg %p63
        $region38: #{tpu_custom_call.1} parent=31 // pred_check_branch
          %181 = sbr.rel (%p179) target = $region40
        $region39: #{tpu_custom_call.1} parent=31 // pred_region
          %182 = dma.done [#allocation6], 2304
        $region40: #{tpu_custom_call.1} parent=31 // pred_fallthru
          _
        %s183 = sand.u32 %s29, 1
        %s184 = scalar_lea.sflag [#allocation3], %s183
        %s185 = sand.u32 %s29, 1
        %s186 = smul.addr %s185, 8
        %s187 = scalar_lea.vmem [#allocation2], %s186
        %p188 = pneg %p42
        %p189 = pneg %p39
        %p190 = pneg %p63
        %p191 = pneg %p60
        %p192 = pneg %p84
        %p193 = pneg %p81
        %p194 = pneg %p110
        %p195 = pneg %p107
        %s196 = sand.u32 %s97, 1
        %s197 = scalar_lea.sflag [#allocation4], %s196
        %s198 = sand.u32 %s97, 1
        %s199 = smul.addr %s198, 8
        %s200 = scalar_lea.vmem [#allocation7], %s199
        %v202 = vld [vmem:[%s174] sm:$0xff]
        %v203 = vlaneseq
        %v204 = vshrl.u32 %v203, 7
        %v205 = vlaneseq
        %v206 = vand.u32 %v205, 127
        %v207 = vshll.u32 %v204, 3
        %v208 = vshra.s32 %v206, 2
        %v209 = vadd.s32 %v207, %v208
        %v210 = vshra.s32 %v209, 3
        %v211 = vand.u32 %v209, 7
        %vm212 = vcmp.lt.s32.totalorder %v210, 7
        %vm213 = vcmp.lt.s32.totalorder %v211, 7
        %vm214 = vmand %vm212, %vm213
        %v215 = vsel %vm214, %v202, 0.0
        %217 = vrot.lane.b32.xlu0 %v215, 100
        %v218 = vpop.permute.xlu0 %217
        %220 = vrot.lane.b32.xlu0 %v215, 4
        %v221 = vpop.permute.xlu0 %220
        %vm223 = vcmask 31744
        %v224 = vsel %vm223, %v218, %v221
        %v226 = vrot.slane %v224, 6
        %vm228 = vcmask 1041408
        %v229 = vsel %vm228, %v226, %v226
        %v231 = vrot.slane %v229, 1
        %vm233 = vcmask 1046528
        %v234 = vsel %vm233, %v231, %v231
        %vm235 = vcmp.lt.s32.totalorder %v206, 4
        %v236 = vsel %vm235, %v229, %v234
        %v237 = vpack.c.bf16 %v236, %v236
        %v238 = vld [vmem:[#allocation5] sm:$0xf]
        %v239 = vld [vmem:[#allocation5 + $0x4] sm:$0xf]
        %v240 = vld [vmem:[#allocation5 + $0x8] sm:$0xf]
        %v241 = vld [vmem:[#allocation5 + $0xc] sm:$0xf]
        %v242 = vsel %vm212, %v202, 0.0
        %v244 = vrot.slane %v242, 7
        %vm246 = vcmask 1040384
        %v247 = vsel %vm246, %v244, %v244
        %v248 = vpack.c.bf16 %v247, %v247
        %s249 = scalar_lea.vmem [#allocation5], 16
        %v250 = vld [vmem:[%s249] sm:$0xf]
        %v251 = vld [vmem:[%s249 + $0x4] sm:$0xf]
        %v252 = vld [vmem:[%s249 + $0x8] sm:$0xf]
        %v253 = vld [vmem:[%s249 + $0xc] sm:$0xf]
        %v258 = vunpack.c.l.b16 %v250
        %v259 = vunpack.c.l.b16 %v251
        %v260 = vunpack.c.l.b16 %v252
        %v261 = vunpack.c.l.b16 %v253
        %v262 = vpack.c.b16 %v259, %v258
        %v263 = vpack.c.b16 %v261, %v260
        %vm266 = vcmask 261120
        %v268 = vsel %vm266, %v248, 0
        %270 = vmatprep.subr.bf16.mxu0 0
        %271 = vmatpush1.bf16.msra.mxu0 0
        %272 = vmatprep.subr.bf16.mxu0 0
        %273 = vmatpush1.bf16.msra.mxu0 0
        %274 = vmatprep.subr.bf16.mxu0 0
        %275 = vmatpush1.bf16.msra.mxu0 0
        %276 = vmatprep.subr.bf16.mxu0 0
        %277 = vmatpush1.bf16.msra.mxu0 0
        %278 = vmatprep.subr.bf16.mxu0 0
        %279 = vmatpush1.bf16.msra.mxu0 0
        %280 = vmatprep.subr.bf16.mxu0 0
        %281 = vmatpush1.bf16.msra.mxu0 0
        %282 = vmatprep.subr.bf16.mxu0 0
        %283 = vmatpush1.bf16.msra.mxu0 %v263
        %284 = vmatprep.subr.bf16.mxu0 0
        %285 = vmatpush1.bf16.msra.mxu0 %v262
        %286 = vmatprep.subr.bf16.mxu0 0
        %287 = vmatpush2.bf16.msra.mxu0 0
        %288 = vmatprep.subr.bf16.mxu0 0
        %289 = vmatpush2.bf16.msra.mxu0 0
        %290 = vmatprep.subr.bf16.mxu0 0
        %291 = vmatpush2.bf16.msra.mxu0 0
        %292 = vmatprep.subr.bf16.mxu0 0
        %293 = vmatpush2.bf16.msra.mxu0 0
        %294 = vmatprep.subr.bf16.mxu0 0
        %295 = vmatpush2.bf16.msra.mxu0 0
        %296 = vmatprep.subr.bf16.mxu0 0
        %297 = vmatpush2.bf16.msra.mxu0 0
        %298 = vmatprep.subr.bf16.mxu0 0
        %299 = vmatpush2.bf16.msra.mxu0 0
        %300 = vmatprep.subr.bf16.mxu0 0
        %301 = vmatpush2.bf16.msra.mxu0 0
        %302 = vmatprep.mubr.bf16.mxu0 0
        %303 = vmatmul.mubr.bf16.gmra.mxu0 %v268
        %v304 = vpop.f32.mrf.mxu0
        %v305 = vadd.f32 0.0, %v304
        %v306 = vpop.f32.mrf.mxu0
        %v307 = vpop.f32.mrf.mxu0
        %v308 = vpop.f32.mrf.mxu0
        %309 = vdwg.mxu0
        %v314 = vunpack.c.l.b16 %v238
        %v315 = vunpack.c.l.b16 %v239
        %v316 = vunpack.c.l.b16 %v240
        %v317 = vunpack.c.l.b16 %v241
        %v318 = vpack.c.b16 %v315, %v314
        %v319 = vpack.c.b16 %v317, %v316
        %v323 = vsel %vm266, %v237, 0
        %325 = vmatprep.subr.bf16.mxu0 0
        %326 = vmatpush1.bf16.msra.mxu0 0
        %327 = vmatprep.subr.bf16.mxu0 0
        %328 = vmatpush1.bf16.msra.mxu0 0
        %329 = vmatprep.subr.bf16.mxu0 0
        %330 = vmatpush1.bf16.msra.mxu0 0
        %331 = vmatprep.subr.bf16.mxu0 0
        %332 = vmatpush1.bf16.msra.mxu0 0
        %333 = vmatprep.subr.bf16.mxu0 0
        %334 = vmatpush1.bf16.msra.mxu0 0
        %335 = vmatprep.subr.bf16.mxu0 0
        %336 = vmatpush1.bf16.msra.mxu0 0
        %337 = vmatprep.subr.bf16.mxu0 0
        %338 = vmatpush1.bf16.msra.mxu0 %v319
        %339 = vmatprep.subr.bf16.mxu0 0
        %340 = vmatpush1.bf16.msra.mxu0 %v318
        %341 = vmatprep.subr.bf16.mxu0 0
        %342 = vmatpush2.bf16.msra.mxu0 0
        %343 = vmatprep.subr.bf16.mxu0 0
        %344 = vmatpush2.bf16.msra.mxu0 0
        %345 = vmatprep.subr.bf16.mxu0 0
        %346 = vmatpush2.bf16.msra.mxu0 0
        %347 = vmatprep.subr.bf16.mxu0 0
        %348 = vmatpush2.bf16.msra.mxu0 0
        %349 = vmatprep.subr.bf16.mxu0 0
        %350 = vmatpush2.bf16.msra.mxu0 0
        %351 = vmatprep.subr.bf16.mxu0 0
        %352 = vmatpush2.bf16.msra.mxu0 0
        %353 = vmatprep.subr.bf16.mxu0 0
        %354 = vmatpush2.bf16.msra.mxu0 0
        %355 = vmatprep.subr.bf16.mxu0 0
        %356 = vmatpush2.bf16.msra.mxu0 0
        %357 = vmatprep.mubr.bf16.mxu0 0
        %358 = vmatmul.mubr.bf16.gmra.mxu0 %v323
        %v359 = vpop.f32.mrf.mxu0
        %v360 = vadd.f32 %v305, %v359
        %v361 = vpop.f32.mrf.mxu0
        %v362 = vpop.f32.mrf.mxu0
        %v363 = vpop.f32.mrf.mxu0
        %364 = vdwg.mxu0
        %vm365 = vcmp.ge.s32.totalorder %v211, 1
        %vm366 = vmand %vm212, %vm365
        %v367 = vsel %vm366, %v202, 0.0
        %369 = vrot.lane.b32.xlu0 %v367, 124
        %v370 = vpop.permute.xlu0 %369
        %372 = vrot.lane.b32.xlu0 %v367, 28
        %v373 = vpop.permute.xlu0 %372
        %vm375 = vcmask 228352
        %v376 = vsel %vm375, %v370, %v373
        %v378 = vrot.slane %v376, 7
        %v380 = vsel %vm246, %v378, %v378
        %v382 = vrot.slane %v380, 1
        %v384 = vsel %vm233, %v382, %v382
        %vm385 = vcmp.lt.s32.totalorder %v206, 28
        %v386 = vsel %vm385, %v380, %v384
        %v387 = vpack.c.bf16 %v386, %v386
        %s388 = scalar_lea.vmem [#allocation5], 32
        %v389 = vld [vmem:[%s388] sm:$0xf]
        %v390 = vld [vmem:[%s388 + $0x4] sm:$0xf]
        %v391 = vld [vmem:[%s388 + $0x8] sm:$0xf]
        %v392 = vld [vmem:[%s388 + $0xc] sm:$0xf]
        %v397 = vunpack.c.l.b16 %v389
        %v398 = vunpack.c.l.b16 %v390
        %v399 = vunpack.c.l.b16 %v391
        %v400 = vunpack.c.l.b16 %v392
        %v401 = vpack.c.b16 %v398, %v397
        %v402 = vpack.c.b16 %v400, %v399
        %v406 = vsel %vm266, %v387, 0
        %408 = vmatprep.subr.bf16.mxu0 0
        %409 = vmatpush1.bf16.msra.mxu0 0
        %410 = vmatprep.subr.bf16.mxu0 0
        %411 = vmatpush1.bf16.msra.mxu0 0
        %412 = vmatprep.subr.bf16.mxu0 0
        %413 = vmatpush1.bf16.msra.mxu0 0
        %414 = vmatprep.subr.bf16.mxu0 0
        %415 = vmatpush1.bf16.msra.mxu0 0
        %416 = vmatprep.subr.bf16.mxu0 0
        %417 = vmatpush1.bf16.msra.mxu0 0
        %418 = vmatprep.subr.bf16.mxu0 0
        %419 = vmatpush1.bf16.msra.mxu0 0
        %420 = vmatprep.subr.bf16.mxu0 0
        %421 = vmatpush1.bf16.msra.mxu0 %v402
        %422 = vmatprep.subr.bf16.mxu0 0
        %423 = vmatpush1.bf16.msra.mxu0 %v401
        %424 = vmatprep.subr.bf16.mxu0 0
        %425 = vmatpush2.bf16.msra.mxu0 0
        %426 = vmatprep.subr.bf16.mxu0 0
        %427 = vmatpush2.bf16.msra.mxu0 0
        %428 = vmatprep.subr.bf16.mxu0 0
        %429 = vmatpush2.bf16.msra.mxu0 0
        %430 = vmatprep.subr.bf16.mxu0 0
        %431 = vmatpush2.bf16.msra.mxu0 0
        %432 = vmatprep.subr.bf16.mxu0 0
        %433 = vmatpush2.bf16.msra.mxu0 0
        %434 = vmatprep.subr.bf16.mxu0 0
        %435 = vmatpush2.bf16.msra.mxu0 0
        %436 = vmatprep.subr.bf16.mxu0 0
        %437 = vmatpush2.bf16.msra.mxu0 0
        %438 = vmatprep.subr.bf16.mxu0 0
        %439 = vmatpush2.bf16.msra.mxu0 0
        %440 = vmatprep.mubr.bf16.mxu0 0
        %441 = vmatmul.mubr.bf16.gmra.mxu0 %v406
        %v442 = vpop.f32.mrf.mxu0
        %v443 = vadd.f32 0.0, %v442
        %v444 = vpop.f32.mrf.mxu0
        %v445 = vpop.f32.mrf.mxu0
        %v446 = vpop.f32.mrf.mxu0
        %447 = vdwg.mxu0
        %v448 = vadd.f32 %v360, %v443
        %v449 = vsel %vm213, %v202, 0.0
        %451 = vrot.lane.b32.xlu0 %v449, 100
        %v452 = vpop.permute.xlu0 %451
        %454 = vrot.lane.b32.xlu0 %v449, 4
        %v455 = vpop.permute.xlu0 %454
        %v457 = vsel %vm223, %v452, %v455
        %v459 = vrot.slane %v457, 7
        %v461 = vsel %vm246, %v459, %v459
        %v463 = vrot.slane %v461, 1
        %v465 = vsel %vm233, %v463, %v463
        %v466 = vsel %vm235, %v461, %v465
        %v467 = vpack.c.bf16 %v466, %v466
        %s468 = scalar_lea.vmem [#allocation5], 48
        %v469 = vld [vmem:[%s468] sm:$0xf]
        %v470 = vld [vmem:[%s468 + $0x4] sm:$0xf]
        %v471 = vld [vmem:[%s468 + $0x8] sm:$0xf]
        %v472 = vld [vmem:[%s468 + $0xc] sm:$0xf]
        %v477 = vunpack.c.l.b16 %v469
        %v478 = vunpack.c.l.b16 %v470
        %v479 = vunpack.c.l.b16 %v471
        %v480 = vunpack.c.l.b16 %v472
        %v481 = vpack.c.b16 %v478, %v477
        %v482 = vpack.c.b16 %v480, %v479
        %v486 = vsel %vm266, %v467, 0
        %488 = vmatprep.subr.bf16.mxu0 0
        %489 = vmatpush1.bf16.msra.mxu0 0
        %490 = vmatprep.subr.bf16.mxu0 0
        %491 = vmatpush1.bf16.msra.mxu0 0
        %492 = vmatprep.subr.bf16.mxu0 0
        %493 = vmatpush1.bf16.msra.mxu0 0
        %494 = vmatprep.subr.bf16.mxu0 0
        %495 = vmatpush1.bf16.msra.mxu0 0
        %496 = vmatprep.subr.bf16.mxu0 0
        %497 = vmatpush1.bf16.msra.mxu0 0
        %498 = vmatprep.subr.bf16.mxu0 0
        %499 = vmatpush1.bf16.msra.mxu0 0
        %500 = vmatprep.subr.bf16.mxu0 0
        %501 = vmatpush1.bf16.msra.mxu0 %v482
        %502 = vmatprep.subr.bf16.mxu0 0
        %503 = vmatpush1.bf16.msra.mxu0 %v481
        %504 = vmatprep.subr.bf16.mxu0 0
        %505 = vmatpush2.bf16.msra.mxu0 0
        %506 = vmatprep.subr.bf16.mxu0 0
        %507 = vmatpush2.bf16.msra.mxu0 0
        %508 = vmatprep.subr.bf16.mxu0 0
        %509 = vmatpush2.bf16.msra.mxu0 0
        %510 = vmatprep.subr.bf16.mxu0 0
        %511 = vmatpush2.bf16.msra.mxu0 0
        %512 = vmatprep.subr.bf16.mxu0 0
        %513 = vmatpush2.bf16.msra.mxu0 0
        %514 = vmatprep.subr.bf16.mxu0 0
        %515 = vmatpush2.bf16.msra.mxu0 0
        %516 = vmatprep.subr.bf16.mxu0 0
        %517 = vmatpush2.bf16.msra.mxu0 0
        %518 = vmatprep.subr.bf16.mxu0 0
        %519 = vmatpush2.bf16.msra.mxu0 0
        %520 = vmatprep.mubr.bf16.mxu0 0
        %521 = vmatmul.mubr.bf16.gmra.mxu0 %v486
        %v522 = vpop.f32.mrf.mxu0
        %v523 = vadd.f32 0.0, %v522
        %v524 = vpop.f32.mrf.mxu0
        %v525 = vpop.f32.mrf.mxu0
        %v526 = vpop.f32.mrf.mxu0
        %527 = vdwg.mxu0
        %v528 = vadd.f32 %v448, %v523
        %v529 = vpack.c.bf16 %v202, %v202
        %s530 = scalar_lea.vmem [#allocation5], 64
        %v531 = vld [vmem:[%s530] sm:$0xf]
        %v532 = vld [vmem:[%s530 + $0x4] sm:$0xf]
        %v533 = vld [vmem:[%s530 + $0x8] sm:$0xf]
        %v534 = vld [vmem:[%s530 + $0xc] sm:$0xf]
        %v539 = vunpack.c.l.b16 %v531
        %v540 = vunpack.c.l.b16 %v532
        %v541 = vunpack.c.l.b16 %v533
        %v542 = vunpack.c.l.b16 %v534
        %v543 = vpack.c.b16 %v540, %v539
        %v544 = vpack.c.b16 %v542, %v541
        %v548 = vsel %vm266, %v529, 0
        %550 = vmatprep.subr.bf16.mxu0 0
        %551 = vmatpush1.bf16.msra.mxu0 0
        %552 = vmatprep.subr.bf16.mxu0 0
        %553 = vmatpush1.bf16.msra.mxu0 0
        %554 = vmatprep.subr.bf16.mxu0 0
        %555 = vmatpush1.bf16.msra.mxu0 0
        %556 = vmatprep.subr.bf16.mxu0 0
        %557 = vmatpush1.bf16.msra.mxu0 0
        %558 = vmatprep.subr.bf16.mxu0 0
        %559 = vmatpush1.bf16.msra.mxu0 0
        %560 = vmatprep.subr.bf16.mxu0 0
        %561 = vmatpush1.bf16.msra.mxu0 0
        %562 = vmatprep.subr.bf16.mxu0 0
        %563 = vmatpush1.bf16.msra.mxu0 %v544
        %564 = vmatprep.subr.bf16.mxu0 0
        %565 = vmatpush1.bf16.msra.mxu0 %v543
        %566 = vmatprep.subr.bf16.mxu0 0
        %567 = vmatpush2.bf16.msra.mxu0 0
        %568 = vmatprep.subr.bf16.mxu0 0
        %569 = vmatpush2.bf16.msra.mxu0 0
        %570 = vmatprep.subr.bf16.mxu0 0
        %571 = vmatpush2.bf16.msra.mxu0 0
        %572 = vmatprep.subr.bf16.mxu0 0
        %573 = vmatpush2.bf16.msra.mxu0 0
        %574 = vmatprep.subr.bf16.mxu0 0
        %575 = vmatpush2.bf16.msra.mxu0 0
        %576 = vmatprep.subr.bf16.mxu0 0
        %577 = vmatpush2.bf16.msra.mxu0 0
        %578 = vmatprep.subr.bf16.mxu0 0
        %579 = vmatpush2.bf16.msra.mxu0 0
        %580 = vmatprep.subr.bf16.mxu0 0
        %581 = vmatpush2.bf16.msra.mxu0 0
        %582 = vmatprep.mubr.bf16.mxu0 0
        %583 = vmatmul.mubr.bf16.gmra.mxu0 %v548
        %v584 = vpop.f32.mrf.mxu0
        %v585 = vadd.f32 0.0, %v584
        %v586 = vpop.f32.mrf.mxu0
        %v587 = vpop.f32.mrf.mxu0
        %v588 = vpop.f32.mrf.mxu0
        %589 = vdwg.mxu0
        %v590 = vadd.f32 %v528, %v585
        %v591 = vsel %vm365, %v202, 0.0
        %593 = vrot.lane.b32.xlu0 %v591, 124
        %v594 = vpop.permute.xlu0 %593
        %596 = vrot.lane.b32.xlu0 %v591, 28
        %v597 = vpop.permute.xlu0 %596
        %v599 = vsel %vm375, %v594, %v597
        %v601 = vrot.slane %v599, 1
        %v603 = vsel %vm233, %v601, %v601
        %v604 = vsel %vm385, %v599, %v603
        %v605 = vpack.c.bf16 %v604, %v604
        %s606 = scalar_lea.vmem [#allocation5], 80
        %v607 = vld [vmem:[%s606] sm:$0xf]
        %v608 = vld [vmem:[%s606 + $0x4] sm:$0xf]
        %v609 = vld [vmem:[%s606 + $0x8] sm:$0xf]
        %v610 = vld [vmem:[%s606 + $0xc] sm:$0xf]
        %v615 = vunpack.c.l.b16 %v607
        %v616 = vunpack.c.l.b16 %v608
        %v617 = vunpack.c.l.b16 %v609
        %v618 = vunpack.c.l.b16 %v610
        %v619 = vpack.c.b16 %v616, %v615
        %v620 = vpack.c.b16 %v618, %v617
        %v624 = vsel %vm266, %v605, 0
        %626 = vmatprep.subr.bf16.mxu0 0
        %627 = vmatpush1.bf16.msra.mxu0 0
        %628 = vmatprep.subr.bf16.mxu0 0
        %629 = vmatpush1.bf16.msra.mxu0 0
        %630 = vmatprep.subr.bf16.mxu0 0
        %631 = vmatpush1.bf16.msra.mxu0 0
        %632 = vmatprep.subr.bf16.mxu0 0
        %633 = vmatpush1.bf16.msra.mxu0 0
        %634 = vmatprep.subr.bf16.mxu0 0
        %635 = vmatpush1.bf16.msra.mxu0 0
        %636 = vmatprep.subr.bf16.mxu0 0
        %637 = vmatpush1.bf16.msra.mxu0 0
        %638 = vmatprep.subr.bf16.mxu0 0
        %639 = vmatpush1.bf16.msra.mxu0 %v620
        %640 = vmatprep.subr.bf16.mxu0 0
        %641 = vmatpush1.bf16.msra.mxu0 %v619
        %642 = vmatprep.subr.bf16.mxu0 0
        %643 = vmatpush2.bf16.msra.mxu0 0
        %644 = vmatprep.subr.bf16.mxu0 0
        %645 = vmatpush2.bf16.msra.mxu0 0
        %646 = vmatprep.subr.bf16.mxu0 0
        %647 = vmatpush2.bf16.msra.mxu0 0
        %648 = vmatprep.subr.bf16.mxu0 0
        %649 = vmatpush2.bf16.msra.mxu0 0
        %650 = vmatprep.subr.bf16.mxu0 0
        %651 = vmatpush2.bf16.msra.mxu0 0
        %652 = vmatprep.subr.bf16.mxu0 0
        %653 = vmatpush2.bf16.msra.mxu0 0
        %654 = vmatprep.subr.bf16.mxu0 0
        %655 = vmatpush2.bf16.msra.mxu0 0
        %656 = vmatprep.subr.bf16.mxu0 0
        %657 = vmatpush2.bf16.msra.mxu0 0
        %658 = vmatprep.mubr.bf16.mxu0 0
        %659 = vmatmul.mubr.bf16.gmra.mxu0 %v624
        %v660 = vpop.f32.mrf.mxu0
        %v661 = vadd.f32 0.0, %v660
        %v662 = vpop.f32.mrf.mxu0
        %v663 = vpop.f32.mrf.mxu0
        %v664 = vpop.f32.mrf.mxu0
        %665 = vdwg.mxu0
        %v666 = vadd.f32 %v590, %v661
        %vm667 = vcmp.ge.s32.totalorder %v210, 1
        %vm668 = vmand %vm667, %vm213
        %v669 = vsel %vm668, %v202, 0.0
        %671 = vrot.lane.b32.xlu0 %v669, 100
        %v672 = vpop.permute.xlu0 %671
        %674 = vrot.lane.b32.xlu0 %v669, 4
        %v675 = vpop.permute.xlu0 %674
        %v677 = vsel %vm223, %v672, %v675
        %v679 = vrot.slane %v677, 1
        %v681 = vsel %vm233, %v679, %v679
        %v682 = vsel %vm235, %v677, %v681
        %v683 = vpack.c.bf16 %v682, %v682
        %s684 = scalar_lea.vmem [#allocation5], 96
        %v685 = vld [vmem:[%s684] sm:$0xf]
        %v686 = vld [vmem:[%s684 + $0x4] sm:$0xf]
        %v687 = vld [vmem:[%s684 + $0x8] sm:$0xf]
        %v688 = vld [vmem:[%s684 + $0xc] sm:$0xf]
        %v693 = vunpack.c.l.b16 %v685
        %v694 = vunpack.c.l.b16 %v686
        %v695 = vunpack.c.l.b16 %v687
        %v696 = vunpack.c.l.b16 %v688
        %v697 = vpack.c.b16 %v694, %v693
        %v698 = vpack.c.b16 %v696, %v695
        %v702 = vsel %vm266, %v683, 0
        %704 = vmatprep.subr.bf16.mxu0 0
        %705 = vmatpush1.bf16.msra.mxu0 0
        %706 = vmatprep.subr.bf16.mxu0 0
        %707 = vmatpush1.bf16.msra.mxu0 0
        %708 = vmatprep.subr.bf16.mxu0 0
        %709 = vmatpush1.bf16.msra.mxu0 0
        %710 = vmatprep.subr.bf16.mxu0 0
        %711 = vmatpush1.bf16.msra.mxu0 0
        %712 = vmatprep.subr.bf16.mxu0 0
        %713 = vmatpush1.bf16.msra.mxu0 0
        %714 = vmatprep.subr.bf16.mxu0 0
        %715 = vmatpush1.bf16.msra.mxu0 0
        %716 = vmatprep.subr.bf16.mxu0 0
        %717 = vmatpush1.bf16.msra.mxu0 %v698
        %718 = vmatprep.subr.bf16.mxu0 0
        %719 = vmatpush1.bf16.msra.mxu0 %v697
        %720 = vmatprep.subr.bf16.mxu0 0
        %721 = vmatpush2.bf16.msra.mxu0 0
        %722 = vmatprep.subr.bf16.mxu0 0
        %723 = vmatpush2.bf16.msra.mxu0 0
        %724 = vmatprep.subr.bf16.mxu0 0
        %725 = vmatpush2.bf16.msra.mxu0 0
        %726 = vmatprep.subr.bf16.mxu0 0
        %727 = vmatpush2.bf16.msra.mxu0 0
        %728 = vmatprep.subr.bf16.mxu0 0
        %729 = vmatpush2.bf16.msra.mxu0 0
        %730 = vmatprep.subr.bf16.mxu0 0
        %731 = vmatpush2.bf16.msra.mxu0 0
        %732 = vmatprep.subr.bf16.mxu0 0
        %733 = vmatpush2.bf16.msra.mxu0 0
        %734 = vmatprep.subr.bf16.mxu0 0
        %735 = vmatpush2.bf16.msra.mxu0 0
        %736 = vmatprep.mubr.bf16.mxu0 0
        %737 = vmatmul.mubr.bf16.gmra.mxu0 %v702
        %v738 = vpop.f32.mrf.mxu0
        %v739 = vadd.f32 0.0, %v738
        %v740 = vpop.f32.mrf.mxu0
        %v741 = vpop.f32.mrf.mxu0
        %v742 = vpop.f32.mrf.mxu0
        %743 = vdwg.mxu0
        %v744 = vadd.f32 %v666, %v739
        %v745 = vsel %vm667, %v202, 0.0
        %v747 = vrot.slane %v745, 1
        %v749 = vsel %vm233, %v747, %v747
        %v750 = vpack.c.bf16 %v749, %v749
        %s751 = scalar_lea.vmem [#allocation5], 112
        %v752 = vld [vmem:[%s751] sm:$0xf]
        %v753 = vld [vmem:[%s751 + $0x4] sm:$0xf]
        %v754 = vld [vmem:[%s751 + $0x8] sm:$0xf]
        %v755 = vld [vmem:[%s751 + $0xc] sm:$0xf]
        %v760 = vunpack.c.l.b16 %v752
        %v761 = vunpack.c.l.b16 %v753
        %v762 = vunpack.c.l.b16 %v754
        %v763 = vunpack.c.l.b16 %v755
        %v764 = vpack.c.b16 %v761, %v760
        %v765 = vpack.c.b16 %v763, %v762
        %v769 = vsel %vm266, %v750, 0
        %771 = vmatprep.subr.bf16.mxu0 0
        %772 = vmatpush1.bf16.msra.mxu0 0
        %773 = vmatprep.subr.bf16.mxu0 0
        %774 = vmatpush1.bf16.msra.mxu0 0
        %775 = vmatprep.subr.bf16.mxu0 0
        %776 = vmatpush1.bf16.msra.mxu0 0
        %777 = vmatprep.subr.bf16.mxu0 0
        %778 = vmatpush1.bf16.msra.mxu0 0
        %779 = vmatprep.subr.bf16.mxu0 0
        %780 = vmatpush1.bf16.msra.mxu0 0
        %781 = vmatprep.subr.bf16.mxu0 0
        %782 = vmatpush1.bf16.msra.mxu0 0
        %783 = vmatprep.subr.bf16.mxu0 0
        %784 = vmatpush1.bf16.msra.mxu0 %v765
        %785 = vmatprep.subr.bf16.mxu0 0
        %786 = vmatpush1.bf16.msra.mxu0 %v764
        %787 = vmatprep.subr.bf16.mxu0 0
        %788 = vmatpush2.bf16.msra.mxu0 0
        %789 = vmatprep.subr.bf16.mxu0 0
        %790 = vmatpush2.bf16.msra.mxu0 0
        %791 = vmatprep.subr.bf16.mxu0 0
        %792 = vmatpush2.bf16.msra.mxu0 0
        %793 = vmatprep.subr.bf16.mxu0 0
        %794 = vmatpush2.bf16.msra.mxu0 0
        %795 = vmatprep.subr.bf16.mxu0 0
        %796 = vmatpush2.bf16.msra.mxu0 0
        %797 = vmatprep.subr.bf16.mxu0 0
        %798 = vmatpush2.bf16.msra.mxu0 0
        %799 = vmatprep.subr.bf16.mxu0 0
        %800 = vmatpush2.bf16.msra.mxu0 0
        %801 = vmatprep.subr.bf16.mxu0 0
        %802 = vmatpush2.bf16.msra.mxu0 0
        %803 = vmatprep.mubr.bf16.mxu0 0
        %804 = vmatmul.mubr.bf16.gmra.mxu0 %v769
        %v805 = vpop.f32.mrf.mxu0
        %v806 = vadd.f32 0.0, %v805
        %v807 = vpop.f32.mrf.mxu0
        %v808 = vpop.f32.mrf.mxu0
        %v809 = vpop.f32.mrf.mxu0
        %810 = vdwg.mxu0
        %v811 = vadd.f32 %v744, %v806
        %vm812 = vmand %vm667, %vm365
        %v813 = vsel %vm812, %v202, 0.0
        %815 = vrot.lane.b32.xlu0 %v813, 124
        %v816 = vpop.permute.xlu0 %815
        %818 = vrot.lane.b32.xlu0 %v813, 28
        %v819 = vpop.permute.xlu0 %818
        %v821 = vsel %vm375, %v816, %v819
        %v823 = vrot.slane %v821, 1
        %v825 = vsel %vm233, %v823, %v823
        %v827 = vrot.slane %v825, 1
        %v829 = vsel %vm233, %v827, %v827
        %v830 = vsel %vm385, %v825, %v829
        %v831 = vpack.c.bf16 %v830, %v830
        %s832 = scalar_lea.vmem [#allocation5], 128
        %v833 = vld [vmem:[%s832] sm:$0xf]
        %v834 = vld [vmem:[%s832 + $0x4] sm:$0xf]
        %v835 = vld [vmem:[%s832 + $0x8] sm:$0xf]
        %v836 = vld [vmem:[%s832 + $0xc] sm:$0xf]
        %v841 = vunpack.c.l.b16 %v833
        %v842 = vunpack.c.l.b16 %v834
        %v843 = vunpack.c.l.b16 %v835
        %v844 = vunpack.c.l.b16 %v836
        %v845 = vpack.c.b16 %v842, %v841
        %v846 = vpack.c.b16 %v844, %v843
        %v850 = vsel %vm266, %v831, 0
        %852 = vmatprep.subr.bf16.mxu0 0
        %853 = vmatpush1.bf16.msra.mxu0 0
        %854 = vmatprep.subr.bf16.mxu0 0
        %855 = vmatpush1.bf16.msra.mxu0 0
        %856 = vmatprep.subr.bf16.mxu0 0
        %857 = vmatpush1.bf16.msra.mxu0 0
        %858 = vmatprep.subr.bf16.mxu0 0
        %859 = vmatpush1.bf16.msra.mxu0 0
        %860 = vmatprep.subr.bf16.mxu0 0
        %861 = vmatpush1.bf16.msra.mxu0 0
        %862 = vmatprep.subr.bf16.mxu0 0
        %863 = vmatpush1.bf16.msra.mxu0 0
        %864 = vmatprep.subr.bf16.mxu0 0
        %865 = vmatpush1.bf16.msra.mxu0 %v846
        %866 = vmatprep.subr.bf16.mxu0 0
        %867 = vmatpush1.bf16.msra.mxu0 %v845
        %868 = vmatprep.subr.bf16.mxu0 0
        %869 = vmatpush2.bf16.msra.mxu0 0
        %870 = vmatprep.subr.bf16.mxu0 0
        %871 = vmatpush2.bf16.msra.mxu0 0
        %872 = vmatprep.subr.bf16.mxu0 0
        %873 = vmatpush2.bf16.msra.mxu0 0
        %874 = vmatprep.subr.bf16.mxu0 0
        %875 = vmatpush2.bf16.msra.mxu0 0
        %876 = vmatprep.subr.bf16.mxu0 0
        %877 = vmatpush2.bf16.msra.mxu0 0
        %878 = vmatprep.subr.bf16.mxu0 0
        %879 = vmatpush2.bf16.msra.mxu0 0
        %880 = vmatprep.subr.bf16.mxu0 0
        %881 = vmatpush2.bf16.msra.mxu0 0
        %882 = vmatprep.subr.bf16.mxu0 0
        %883 = vmatpush2.bf16.msra.mxu0 0
        %884 = vmatprep.mubr.bf16.mxu0 0
        %885 = vmatmul.mubr.bf16.gmra.mxu0 %v850
        %v886 = vpop.f32.mrf.mxu0
        %v887 = vadd.f32 0.0, %v886
        %v888 = vpop.f32.mrf.mxu0
        %v889 = vpop.f32.mrf.mxu0
        %v890 = vpop.f32.mrf.mxu0
        %891 = vdwg.mxu0
        %v892 = vadd.f32 %v811, %v887
        %v893 = vld [vmem:[%s2] sm:$0x1]
        %v895 = vlaneseq
        %v896 = vshrl.u32 %v895, 7
        %v897 = vsub.s32 0, %v896
        %v898 = vrot.slane %v893, %v897
        %v900 = vadd.f32 %v892, %v898
        %v901 = vmax.f32 %v900, 0.0
        %902 = vst [vmem:[%s200] sm:$0xff] %v901
        %s903 = sand.u32 %s97, 1
        %s904 = scalar_lea.sflag [#allocation4], %s903
        %s905 = sand.u32 %s97, 1
        %s906 = smul.addr %s905, 8
        %s907 = scalar_lea.vmem [#allocation7], %s906
        // Predicated region
        $region41: #{tpu_custom_call.1} parent=31 // pred_check
          %p908 = pneg %p107
        $region42: #{tpu_custom_call.1} parent=31 // pred_check_branch
          %910 = sbr.rel (%p908) target = $region44
        $region43: #{tpu_custom_call.1} parent=31 // pred_region
          %s912 = ssub.s32 128, 128
          %913 = vsyncadd %s904, %s912
          %s914 = smul.addr %s21, 128
          %s915 = scalar_lea.hbm %s3, %s914
          %s917 = sshll.u32 %s907, 4
          %s918 = int_to_ptr.vmem [resolvable:$true] %s917
          %920 = dma.vmem_to_hbm [thread:$0]  %s918, 128, %s915, %s904
        $region44: #{tpu_custom_call.1} parent=31 // pred_fallthru
          _
      $region32: #{tpu_custom_call.1} parent=5 // pred_fallthru
        _
      %p921 = scmp.le.s32.totalorder 2, %s16
      // Predicated region
      $region45: #{tpu_custom_call.1} parent=5 // pred_check
        %p922 = pneg %p921
      $region46: #{tpu_custom_call.1} parent=5 // pred_check_branch
        %924 = sbr.rel (%p922) target = $region48
      $region47: #{tpu_custom_call.1} parent=5 // pred_region
        %s925 = ssub.s32 %s16, 2
        // Predicated region
        $region49: #{tpu_custom_call.1} parent=47 // pred_check
          %p926 = pneg %p113
        $region50: #{tpu_custom_call.1} parent=47 // pred_check_branch
          %928 = sbr.rel (%p926) target = $region52
        $region51: #{tpu_custom_call.1} parent=47 // pred_region
          %s929 = sand.u32 %s98, 1
          %s930 = scalar_lea.sflag [#allocation4], %s929
          %s931 = sand.u32 %s98, 1
          %s932 = smul.addr %s931, 8
          %s933 = scalar_lea.vmem [#allocation7], %s932
          %934 = dma.done %s930, 128
        $region52: #{tpu_custom_call.1} parent=47 // pred_fallthru
          _
      $region48: #{tpu_custom_call.1} parent=5 // pred_fallthru
        _
    $region6: #{tpu_custom_call.1} parent=1 // loop_footer
      %s20 = sadd.s32 1, %s16
    $region7: #{tpu_custom_call.1} parent=1 // loop_footer_branch
      %15 = sbr.rel target = $region3
    $region8: #{tpu_custom_call.1} parent=1 // loop_exit
      _
    %935 = vsyncpa [#allocation3], 1
    %s936 = scalar_lea.sflag [#allocation3], 1
    %937 = vsyncpa %s936, 1
    %938 = vsyncpa [#allocation6], 1
    %939 = vsyncpa [#allocation4], 1
    %s940 = scalar_lea.sflag [#allocation4], 1
    %941 = vsyncpa %s940, 1

</llo_original>
